<compile_context>
chip_gen: v7x
topology: tpu7x:2x2x1
jax: 0.10.0
libtpu: 0.0.40
codegen_flags: <defaults>
</compile_context>

<pallas_src>
import functools
import math

import jax
import jax.numpy as jnp
import numpy as np
from jax import lax
from jax.experimental import pallas as pl
from jax.experimental.pallas import tpu as pltpu


# Scales with fewer elements than this run in plain JAX/XLA.
_PALLAS_MIN_ELEMS = 16384


def _chip_vmem_bytes():
    """Physical VMEM per TensorCore, best effort (conservative on failure)."""
    try:
        info = pltpu.get_tpu_info()
        for name in ("vmem_capacity_bytes", "vmem_bytes", "vmem_size_bytes"):
            v = getattr(info, name, None)
            if v:
                return int(v)
    except Exception:
        pass
    return 64 << 20  # assume the smallest (v7x-class) budget if unknown


def _chip_config():
    """Generation-aware tiling budget."""
    vmem = _chip_vmem_bytes()
    if vmem > (96 << 20):
        # v5e / v6e: 128 MiB physical VMEM, one TensorCore per chip -> big
        # row tiles amortize the ~0.35 us per-grid-step overhead.
        return {"tm_target": 4 << 20, "tm_max": 512,
                "vmem_limit": 64 << 20, "cores": 1}
    # v7x-class: 64 MiB VMEM per TC, 2 TCs share the "parallel" grid axis ->
    # cap the tile and balance the tile count across the two cores.
    return {"tm_target": 3 << 19, "tm_max": 256,
            "vmem_limit": 48 << 20, "cores": 2}


def _choose_row_tile(H, W, cfg):
    bytes_per_row = 4 * W
    tm_cap = cfg["tm_target"] // bytes_per_row
    tm_cap = max(8, min(cfg["tm_max"], (tm_cap // 8) * 8))
    nb = max(1, -(-H // tm_cap))
    if cfg["cores"] > 1 and H >= 16:
        # Balance across TensorCores (e.g. H=272 -> 2x136, not 256+16).
        nb = -(-nb // cfg["cores"]) * cfg["cores"]
    if nb == 1:
        return H                                  # single full-height tile
    tm = -(-H // nb)
    return max(8, -(-tm // 8) * 8)


def _atan01(r):
    """arctan for r in [0, 1]: odd minimax polynomial (A&S 4.4.49, |err| <= 1e-5)."""
    z = r * r
    p = ((((jnp.float32(0.0208351) * z - jnp.float32(0.0851330)) * z
           + jnp.float32(0.1801410)) * z - jnp.float32(0.3302995)) * z
         + jnp.float32(0.9998660))
    return p * r


def _angle(dy, dx):
    """atan(dy / (dx + 1e-10)) via an atan2-style reduction.

    One EUP approx reciprocal per angle; Mosaic has no native atan
    transcendental so the [0, 1] core uses a minimax polynomial on the VPU.
    """
    v = dx + jnp.float32(1e-10)
    au = jnp.abs(dy)
    av = jnp.abs(v)
    r = jnp.minimum(au, av) * pl.reciprocal(jnp.maximum(au, av), approx=True)
    a = _atan01(r)
    a = jnp.where(au > av, jnp.float32(math.pi / 2) - a, a)
    return jnp.where(jnp.logical_xor(dy < 0.0, v < 0.0), -a, a)


def _grad_loss_kernel(pred_ref, gt_ref, pprev_ref, gprev_ref, out_ref, *,
                      H, max_depth):
    """One row tile -> packed (8,384) slab: [sum|mag_p-mag_g|, sum|ang_p-ang_g|, count]."""
    TM, W = pred_ref.shape
    j = pl.program_id(0)

    pred = pred_ref[...]
    gt = gt_ref[...]

    row = lax.broadcasted_iota(jnp.int32, (TM, W), 0)
    col = lax.broadcasted_iota(jnp.int32, (TM, W), 1)
    is_row0 = row == 0

    # Finite differences via XLU rolls; row 0 of the tile uses the carried-in
    # halo row, the wrapped column is masked out below.
    p_lf = pltpu.roll(pred, shift=1, axis=1)
    p_up = jnp.where(is_row0, pprev_ref[0], pltpu.roll(pred, shift=1, axis=0))
    dpx = pred - p_lf
    dpy = pred - p_up

    g_lf = pltpu.roll(gt, shift=1, axis=1)
    g_up = jnp.where(is_row0, gprev_ref[0], pltpu.roll(gt, shift=1, axis=0))
    dgx = gt - g_lf
    dgy = gt - g_up

    def valid(g):
        m = g > 0.0
        if max_depth is not None:                 # trace-time branch
            m = jnp.logical_and(m, g <= jnp.float32(max_depth))
        return m

    # Tile-row bounds as scalars (scalar unit) instead of a per-element global
    # row tile: drop global row 0 / col 0 (the reference's [1:, 1:] window) and
    # the padded OOB rows of a partially out-of-bounds last tile.
    lo = jnp.where(j == 0, jnp.int32(1), jnp.int32(0))
    hi = H - j * TM
    mg = valid(gt) & valid(g_lf) & valid(g_up)
    mg = mg & (row >= lo) & (row < hi) & (col >= 1)

    zero = jnp.float32(0.0)

    # Magnitude term first so its temporaries die before the atan work starts.
    mag_diff = jnp.abs((dpx * dpx + dpy * dpy) - (dgx * dgx + dgy * dgy))
    s_mag = jnp.sum(jnp.where(mg, mag_diff, zero), keepdims=True)

    ang_diff = jnp.abs(_angle(dpy, dpx) - _angle(dgy, dgx))
    s_ang = jnp.sum(jnp.where(mg, ang_diff, zero), keepdims=True)

    s_cnt = jnp.sum(mg.astype(jnp.float32), keepdims=True)

    # One lane-dense (8, 384) store -> one output DMA per grid step.
    out_ref[...] = jnp.concatenate(
        [jnp.broadcast_to(s_mag, (8, 128)),
         jnp.broadcast_to(s_ang, (8, 128)),
         jnp.broadcast_to(s_cnt, (8, 128))], axis=-1)[None]


def _scale_sums_pallas(pred, gt, max_depth, tm=None):
    """Masked gradient-loss sums for one (H, W) scale via the Pallas kernel."""
    pred = pred.astype(jnp.float32)
    gt = gt.astype(jnp.float32)
    H, W = pred.shape
    cfg = _chip_config()
    if tm is None:
        tm = _choose_row_tile(H, W, cfg)
    nb = -(-H // tm)

    def prev_rows(x):
        # prev_rows[j] = x[j*tm - 1]: halo row for tile j (tile 0 gets a dummy
        # row; global row 0 is masked out in the kernel anyway).
        if nb > 1:
            p = jnp.concatenate([x[:1], x[tm - 1:(nb - 1) * tm:tm]], axis=0)
        else:
            p = x[:1]
        return p[:, None, :]                      # (nb, 1, W)

    kernel = functools.partial(_grad_loss_kernel, H=H, max_depth=max_depth)

    out = pl.pallas_call(
        kernel,
        grid=(nb,),
        in_specs=[
            pl.BlockSpec((tm, W), lambda j: (j, 0)),
            pl.BlockSpec((tm, W), lambda j: (j, 0)),
            pl.BlockSpec((1, 1, W), lambda j: (j, 0, 0)),
            pl.BlockSpec((1, 1, W), lambda j: (j, 0, 0)),
        ],
        out_specs=pl.BlockSpec((1, 8, 384), lambda j: (j, 0, 0)),
        out_shape=jax.ShapeDtypeStruct((nb, 8, 384), jnp.float32),
        compiler_params=pltpu.CompilerParams(
            dimension_semantics=("parallel",),    # row tiles are independent
            vmem_limit_bytes=cfg["vmem_limit"],
        ),
    )(pred, gt, prev_rows(pred), prev_rows(gt))

    sums = out[:, 0, :]                           # (nb, 384)
    return sums[:, 0].sum(), sums[:, 128].sum(), sums[:, 256].sum()


def _scale_sums_jax(pred, gt, max_depth):
    """Exact plain-JAX path (tiny downsampled scales + reference)."""
    pred = pred.astype(jnp.float32)
    gt = gt.astype(jnp.float32)
    mask = gt > 0
    if max_depth is not None:
        mask = jnp.logical_and(mask, gt <= max_depth)
    dpx = pred[1:, 1:] - pred[1:, :-1]
    dpy = pred[1:, 1:] - pred[:-1, 1:]
    dgx = gt[1:, 1:] - gt[1:, :-1]
    dgy = gt[1:, 1:] - gt[:-1, 1:]
    mag_p = dpx * dpx + dpy * dpy
    mag_g = dgx * dgx + dgy * dgy
    ang_p = jnp.arctan(dpy / (dpx + 1e-10))
    ang_g = jnp.arctan(dgy / (dgx + 1e-10))
    mg = mask[1:, 1:] & mask[1:, :-1] & mask[:-1, 1:]
    mgf = mg.astype(jnp.float32)
    return (jnp.sum(jnp.abs(mag_p - mag_g) * mgf),
            jnp.sum(jnp.abs(ang_p - ang_g) * mgf),
            jnp.sum(mgf))


class GradientLoss:
    """JAX/Pallas port of the PyTorch GradientLoss module (forward pass only)."""

    def __init__(self, valid_mask=True, loss_weight=1.0, max_depth=None,
                 loss_name="loss_grad"):
        # NOTE: the reference only defines `mask` when valid_mask=True; we
        # always apply the gt>0 [& <= max_depth] mask, matching that path.
        self.valid_mask = valid_mask
        self.loss_weight = loss_weight
        self.max_depth = max_depth
        self.loss_name = loss_name
        self.eps = 0.001              # unused in forward, kept for parity

    def gradientloss(self, inp, target):
        # Multi-scale: full res + strides 2, 4, 6 (x[::2*i, ::2*i], i=1..3).
        inputs = [inp] + [inp[::2 * i, ::2 * i] for i in range(1, 4)]
        targets = [target] + [target[::2 * i, ::2 * i] for i in range(1, 4)]
        losses = []
        for p, g in zip(inputs, targets):
            if p.shape[0] * p.shape[1] >= _PALLAS_MIN_ELEMS:
                s_mag, s_ang, cnt = _scale_sums_pallas(p, g, self.max_depth)
            else:
                s_mag, s_ang, cnt = _scale_sums_jax(p, g, self.max_depth)
            # F.l1_loss(pred[mask], gt[mask]) == masked_sum / count for both
            # terms (NaN if the mask is empty, matching the reference).
            losses.append((s_mag + s_ang) / cnt)
        return jnp.mean(jnp.stack(losses))

    def __call__(self, depth_pred, depth_gt, img_meta=None):
        return self.loss_weight * self.gradientloss(depth_pred, depth_gt)


# ---------------- pure-JAX reference (for sanity checking) ----------------
def _ref_loss(pred, gt, loss_weight=1.0, max_depth=None):
    preds = [pred] + [pred[::2 * i, ::2 * i] for i in range(1, 4)]
    gts = [gt] + [gt[::2 * i, ::2 * i] for i in range(1, 4)]
    losses = []
    for p, g in zip(preds, gts):
        s_mag, s_ang, cnt = _scale_sums_jax(p, g, max_depth)
        losses.append((s_mag + s_ang) / cnt)
    return loss_weight * jnp.mean(jnp.stack(losses))


if __name__ == "__main__":
    key = jax.random.PRNGKey(0)
    k1, k2, k3 = jax.random.split(key, 3)

    # (272, 256): full-res and stride-2 scales go through Pallas, strides 4/6
    # fall back to plain JAX.
    H, W = 272, 256
    depth_pred = jax.random.uniform(k1, (H, W), jnp.float32, minval=0.0, maxval=10.0)
    depth_gt = jax.random.uniform(k2, (H, W), jnp.float32, minval=0.1, maxval=10.0)
    keep = (jax.random.uniform(k3, (H, W), jnp.float32) > 0.1).astype(jnp.float32)
    depth_gt = depth_gt * keep        # ~10% invalid (gt == 0) pixels

    # Multi-tile / halo-row path check: force small (64-row) tiles.
    tiled = jax.jit(functools.partial(_scale_sums_pallas, max_depth=None, tm=64))
    got = jax.block_until_ready(tiled(depth_pred, depth_gt))
    want = _scale_sums_jax(depth_pred, depth_gt, None)
    for g_val, w_val in zip(got, want):
        assert np.allclose(np.asarray(g_val), np.asarray(w_val),
                           rtol=5e-3, atol=1e-2), (g_val, w_val)

    for max_depth in (None, 8.0):
        loss_mod = GradientLoss(valid_mask=True, loss_weight=1.0, max_depth=max_depth)
        loss_fn = jax.jit(lambda p, g: loss_mod(p, g, img_meta=None))
        out = jax.block_until_ready(loss_fn(depth_pred, depth_gt))

        ref_fn = jax.jit(functools.partial(_ref_loss, max_depth=max_depth))
        ref = jax.block_until_ready(ref_fn(depth_pred, depth_gt))

        assert np.isfinite(np.asarray(out)).all(), (max_depth, out)
        # approx reciprocal + minimax atan vs exact arctan: few-1e-4 absolute
        # error on an O(10) loss — well inside this tolerance.
        assert np.allclose(np.asarray(out), np.asarray(ref),
                           rtol=5e-3, atol=2e-3), (max_depth, out, ref)

    print("KERNEL_OK")
</pallas_src>

<mosaic_0001>
module attributes {stable_mosaic.version = 11 : i64} {
  func.func @_grad_loss_kernel(%arg0: i32, %arg1: memref<64x256xf32, #tpu.memory_space<vmem>>, %arg2: memref<64x256xf32, #tpu.memory_space<vmem>>, %arg3: memref<1x1x256xf32, #tpu.memory_space<vmem>>, %arg4: memref<1x1x256xf32, #tpu.memory_space<vmem>>, %arg5: memref<1x8x384xf32, #tpu.memory_space<vmem>>) attributes {dimension_semantics = [#tpu.dimension_semantics<parallel>], iteration_bounds = array<i64: 5>, scalar_prefetch = 0 : i64, scratch_operands = 0 : i64, tpu.core_type = #tpu.core_type<tc>, window_params = [{transform_indices = @transform_0, window_bounds = array<i64: 64, 256>}, {transform_indices = @transform_1, window_bounds = array<i64: 64, 256>}, {transform_indices = @transform_2, window_bounds = array<i64: 1, 1, 256>}, {transform_indices = @transform_3, window_bounds = array<i64: 1, 1, 256>}, {transform_indices = @transform_4, window_bounds = array<i64: 1, 8, 384>}]} {
    %c0 = arith.constant 0 : index
    %c0_0 = arith.constant 0 : index
    %0 = vector.load %arg1[%c0, %c0_0] : memref<64x256xf32, #tpu.memory_space<vmem>>, vector<64x256xf32>
    %c0_1 = arith.constant 0 : index
    %c0_2 = arith.constant 0 : index
    %1 = vector.load %arg2[%c0_1, %c0_2] : memref<64x256xf32, #tpu.memory_space<vmem>>, vector<64x256xf32>
    %2 = tpu.iota {dimensions = array<i32: 0>} : vector<64x256xi32>
    %3 = tpu.iota {dimensions = array<i32: 1>} : vector<64x256xi32>
    %c0_i32 = arith.constant 0 : i32
    %4 = vector.broadcast %c0_i32 : i32 to vector<64x256xi32>
    %5 = arith.cmpi eq, %2, %4 : vector<64x256xi32>
    %c1_i32 = arith.constant 1 : i32
    %6 = tpu.dynamic_rotate %0 by %c1_i32 dim 1 : vector<64x256xf32>, i32 -> vector<64x256xf32>
    %c0_3 = arith.constant 0 : index
    %c0_4 = arith.constant 0 : index
    %c0_5 = arith.constant 0 : index
    %7 = vector.load %arg3[%c0_3, %c0_4, %c0_5] : memref<1x1x256xf32, #tpu.memory_space<vmem>>, vector<1x1x256xf32>
    %8 = vector.shape_cast %7 : vector<1x1x256xf32> to vector<1x256xf32>
    %c1_i32_6 = arith.constant 1 : i32
    %9 = tpu.dynamic_rotate %0 by %c1_i32_6 dim 0 : vector<64x256xf32>, i32 -> vector<64x256xf32>
    %10 = vector.shape_cast %8 : vector<1x256xf32> to vector<1x256xf32>
    %11 = vector.broadcast %10 : vector<1x256xf32> to vector<64x256xf32>
    %12 = arith.select %5, %11, %9 : vector<64x256xi1>, vector<64x256xf32>
    %13 = arith.subf %0, %6 : vector<64x256xf32>
    %14 = arith.subf %0, %12 : vector<64x256xf32>
    %c1_i32_7 = arith.constant 1 : i32
    %15 = tpu.dynamic_rotate %1 by %c1_i32_7 dim 1 : vector<64x256xf32>, i32 -> vector<64x256xf32>
    %c0_8 = arith.constant 0 : index
    %c0_9 = arith.constant 0 : index
    %c0_10 = arith.constant 0 : index
    %16 = vector.load %arg4[%c0_8, %c0_9, %c0_10] : memref<1x1x256xf32, #tpu.memory_space<vmem>>, vector<1x1x256xf32>
    %17 = vector.shape_cast %16 : vector<1x1x256xf32> to vector<1x256xf32>
    %c1_i32_11 = arith.constant 1 : i32
    %18 = tpu.dynamic_rotate %1 by %c1_i32_11 dim 0 : vector<64x256xf32>, i32 -> vector<64x256xf32>
    %19 = vector.shape_cast %17 : vector<1x256xf32> to vector<1x256xf32>
    %20 = vector.broadcast %19 : vector<1x256xf32> to vector<64x256xf32>
    %21 = arith.select %5, %20, %18 : vector<64x256xi1>, vector<64x256xf32>
    %22 = arith.subf %1, %15 : vector<64x256xf32>
    %23 = arith.subf %1, %21 : vector<64x256xf32>
    %c0_i32_12 = arith.constant 0 : i32
    %24 = arith.cmpi eq, %arg0, %c0_i32_12 : i32
    %c1_i32_13 = arith.constant 1 : i32
    %c0_i32_14 = arith.constant 0 : i32
    %25 = arith.select %24, %c1_i32_13, %c0_i32_14 : i32
    %c64_i32 = arith.constant 64 : i32
    %26 = arith.muli %arg0, %c64_i32 : i32
    %c272_i32 = arith.constant 272 : i32
    %27 = arith.subi %c272_i32, %26 : i32
    %cst = arith.constant 0.000000e+00 : f32
    %28 = vector.broadcast %cst : f32 to vector<64x256xf32>
    %29 = arith.cmpf ogt, %1, %28 : vector<64x256xf32>
    %cst_15 = arith.constant 0.000000e+00 : f32
    %30 = vector.broadcast %cst_15 : f32 to vector<64x256xf32>
    %31 = arith.cmpf ogt, %15, %30 : vector<64x256xf32>
    %32 = arith.andi %29, %31 : vector<64x256xi1>
    %cst_16 = arith.constant 0.000000e+00 : f32
    %33 = vector.broadcast %cst_16 : f32 to vector<64x256xf32>
    %34 = arith.cmpf ogt, %21, %33 : vector<64x256xf32>
    %35 = arith.andi %32, %34 : vector<64x256xi1>
    %36 = vector.broadcast %25 : i32 to vector<64x256xi32>
    %37 = arith.cmpi sge, %2, %36 : vector<64x256xi32>
    %38 = arith.andi %35, %37 : vector<64x256xi1>
    %39 = vector.broadcast %27 : i32 to vector<64x256xi32>
    %40 = arith.cmpi slt, %2, %39 : vector<64x256xi32>
    %41 = arith.andi %38, %40 : vector<64x256xi1>
    %c1_i32_17 = arith.constant 1 : i32
    %42 = vector.broadcast %c1_i32_17 : i32 to vector<64x256xi32>
    %43 = arith.cmpi sge, %3, %42 : vector<64x256xi32>
    %44 = arith.andi %41, %43 : vector<64x256xi1>
    %45 = arith.mulf %13, %13 : vector<64x256xf32>
    %46 = arith.mulf %14, %14 : vector<64x256xf32>
    %47 = arith.addf %45, %46 : vector<64x256xf32>
    %48 = arith.mulf %22, %22 : vector<64x256xf32>
    %49 = arith.mulf %23, %23 : vector<64x256xf32>
    %50 = arith.addf %48, %49 : vector<64x256xf32>
    %51 = arith.subf %47, %50 : vector<64x256xf32>
    %52 = math.absf %51 : vector<64x256xf32>
    %cst_18 = arith.constant 0.000000e+00 : f32
    %53 = vector.broadcast %cst_18 : f32 to vector<64x256xf32>
    %54 = arith.select %44, %52, %53 : vector<64x256xi1>, vector<64x256xf32>
    %55 = vector.shape_cast %54 : vector<64x256xf32> to vector<1x64x256xf32>
    %cst_19 = arith.constant dense<0.000000e+00> : vector<1xf32>
    %56 = vector.multi_reduction <add>, %55, %cst_19 [1, 2] : vector<1x64x256xf32> to vector<1xf32>
    %57 = vector.shape_cast %56 : vector<1xf32> to vector<1x1x1xf32>
    %58 = vector.extract %57[0, 0, 0] : f32 from vector<1x1x1xf32>
    %59 = vector.broadcast %58 : f32 to vector<1x1xf32>
    %cst_20 = arith.constant 1.000000e-10 : f32
    %60 = vector.broadcast %cst_20 : f32 to vector<64x256xf32>
    %61 = arith.addf %13, %60 : vector<64x256xf32>
    %62 = math.absf %14 : vector<64x256xf32>
    %63 = math.absf %61 : vector<64x256xf32>
    %64 = arith.minimumf %62, %63 : vector<64x256xf32>
    %65 = arith.maximumf %62, %63 : vector<64x256xf32>
    %66 = tpu.reciprocal %65 {approx = true} : vector<64x256xf32> -> vector<64x256xf32>
    %67 = arith.mulf %64, %66 : vector<64x256xf32>
    %68 = arith.mulf %67, %67 : vector<64x256xf32>
    %cst_21 = arith.constant 2.083510e-02 : f32
    %69 = vector.broadcast %cst_21 : f32 to vector<64x256xf32>
    %70 = arith.mulf %69, %68 : vector<64x256xf32>
    %cst_22 = arith.constant 8.513300e-02 : f32
    %71 = vector.broadcast %cst_22 : f32 to vector<64x256xf32>
    %72 = arith.subf %70, %71 : vector<64x256xf32>
    %73 = arith.mulf %72, %68 : vector<64x256xf32>
    %cst_23 = arith.constant 1.801410e-01 : f32
    %74 = vector.broadcast %cst_23 : f32 to vector<64x256xf32>
    %75 = arith.addf %73, %74 : vector<64x256xf32>
    %76 = arith.mulf %75, %68 : vector<64x256xf32>
    %cst_24 = arith.constant 0.330299497 : f32
    %77 = vector.broadcast %cst_24 : f32 to vector<64x256xf32>
    %78 = arith.subf %76, %77 : vector<64x256xf32>
    %79 = arith.mulf %78, %68 : vector<64x256xf32>
    %cst_25 = arith.constant 9.998660e-01 : f32
    %80 = vector.broadcast %cst_25 : f32 to vector<64x256xf32>
    %81 = arith.addf %79, %80 : vector<64x256xf32>
    %82 = arith.mulf %81, %67 : vector<64x256xf32>
    %83 = arith.cmpf ogt, %62, %63 : vector<64x256xf32>
    %cst_26 = arith.constant 1.57079637 : f32
    %84 = vector.broadcast %cst_26 : f32 to vector<64x256xf32>
    %85 = arith.subf %84, %82 : vector<64x256xf32>
    %86 = arith.select %83, %85, %82 : vector<64x256xi1>, vector<64x256xf32>
    %cst_27 = arith.constant 0.000000e+00 : f32
    %87 = vector.broadcast %cst_27 : f32 to vector<64x256xf32>
    %88 = arith.cmpf olt, %14, %87 : vector<64x256xf32>
    %cst_28 = arith.constant 0.000000e+00 : f32
    %89 = vector.broadcast %cst_28 : f32 to vector<64x256xf32>
    %90 = arith.cmpf olt, %61, %89 : vector<64x256xf32>
    %91 = arith.xori %88, %90 : vector<64x256xi1>
    %cst_29 = arith.constant 0.000000e+00 : f32
    %92 = vector.broadcast %cst_29 : f32 to vector<64x256xf32>
    %93 = arith.subf %92, %86 : vector<64x256xf32>
    %94 = arith.select %91, %93, %86 : vector<64x256xi1>, vector<64x256xf32>
    %cst_30 = arith.constant 1.000000e-10 : f32
    %95 = vector.broadcast %cst_30 : f32 to vector<64x256xf32>
    %96 = arith.addf %22, %95 : vector<64x256xf32>
    %97 = math.absf %23 : vector<64x256xf32>
    %98 = math.absf %96 : vector<64x256xf32>
    %99 = arith.minimumf %97, %98 : vector<64x256xf32>
    %100 = arith.maximumf %97, %98 : vector<64x256xf32>
    %101 = tpu.reciprocal %100 {approx = true} : vector<64x256xf32> -> vector<64x256xf32>
    %102 = arith.mulf %99, %101 : vector<64x256xf32>
    %103 = arith.mulf %102, %102 : vector<64x256xf32>
    %cst_31 = arith.constant 2.083510e-02 : f32
    %104 = vector.broadcast %cst_31 : f32 to vector<64x256xf32>
    %105 = arith.mulf %104, %103 : vector<64x256xf32>
    %cst_32 = arith.constant 8.513300e-02 : f32
    %106 = vector.broadcast %cst_32 : f32 to vector<64x256xf32>
    %107 = arith.subf %105, %106 : vector<64x256xf32>
    %108 = arith.mulf %107, %103 : vector<64x256xf32>
    %cst_33 = arith.constant 1.801410e-01 : f32
    %109 = vector.broadcast %cst_33 : f32 to vector<64x256xf32>
    %110 = arith.addf %108, %109 : vector<64x256xf32>
    %111 = arith.mulf %110, %103 : vector<64x256xf32>
    %cst_34 = arith.constant 0.330299497 : f32
    %112 = vector.broadcast %cst_34 : f32 to vector<64x256xf32>
    %113 = arith.subf %111, %112 : vector<64x256xf32>
    %114 = arith.mulf %113, %103 : vector<64x256xf32>
    %cst_35 = arith.constant 9.998660e-01 : f32
    %115 = vector.broadcast %cst_35 : f32 to vector<64x256xf32>
    %116 = arith.addf %114, %115 : vector<64x256xf32>
    %117 = arith.mulf %116, %102 : vector<64x256xf32>
    %118 = arith.cmpf ogt, %97, %98 : vector<64x256xf32>
    %cst_36 = arith.constant 1.57079637 : f32
    %119 = vector.broadcast %cst_36 : f32 to vector<64x256xf32>
    %120 = arith.subf %119, %117 : vector<64x256xf32>
    %121 = arith.select %118, %120, %117 : vector<64x256xi1>, vector<64x256xf32>
    %cst_37 = arith.constant 0.000000e+00 : f32
    %122 = vector.broadcast %cst_37 : f32 to vector<64x256xf32>
    %123 = arith.cmpf olt, %23, %122 : vector<64x256xf32>
    %cst_38 = arith.constant 0.000000e+00 : f32
    %124 = vector.broadcast %cst_38 : f32 to vector<64x256xf32>
    %125 = arith.cmpf olt, %96, %124 : vector<64x256xf32>
    %126 = arith.xori %123, %125 : vector<64x256xi1>
    %cst_39 = arith.constant 0.000000e+00 : f32
    %127 = vector.broadcast %cst_39 : f32 to vector<64x256xf32>
    %128 = arith.subf %127, %121 : vector<64x256xf32>
    %129 = arith.select %126, %128, %121 : vector<64x256xi1>, vector<64x256xf32>
    %130 = arith.subf %94, %129 : vector<64x256xf32>
    %131 = math.absf %130 : vector<64x256xf32>
    %cst_40 = arith.constant 0.000000e+00 : f32
    %132 = vector.broadcast %cst_40 : f32 to vector<64x256xf32>
    %133 = arith.select %44, %131, %132 : vector<64x256xi1>, vector<64x256xf32>
    %134 = vector.shape_cast %133 : vector<64x256xf32> to vector<1x64x256xf32>
    %cst_41 = arith.constant dense<0.000000e+00> : vector<1xf32>
    %135 = vector.multi_reduction <add>, %134, %cst_41 [1, 2] : vector<1x64x256xf32> to vector<1xf32>
    %136 = vector.shape_cast %135 : vector<1xf32> to vector<1x1x1xf32>
    %137 = vector.extract %136[0, 0, 0] : f32 from vector<1x1x1xf32>
    %138 = vector.broadcast %137 : f32 to vector<1x1xf32>
    %139 = arith.extui %44 : vector<64x256xi1> to vector<64x256xi32>
    %140 = arith.sitofp %139 : vector<64x256xi32> to vector<64x256xf32>
    %141 = vector.shape_cast %140 : vector<64x256xf32> to vector<1x64x256xf32>
    %cst_42 = arith.constant dense<0.000000e+00> : vector<1xf32>
    %142 = vector.multi_reduction <add>, %141, %cst_42 [1, 2] : vector<1x64x256xf32> to vector<1xf32>
    %143 = vector.shape_cast %142 : vector<1xf32> to vector<1x1x1xf32>
    %144 = vector.extract %143[0, 0, 0] : f32 from vector<1x1x1xf32>
    %145 = vector.broadcast %144 : f32 to vector<1x1xf32>
    %146 = vector.shape_cast %59 : vector<1x1xf32> to vector<1x1xf32>
    %147 = vector.broadcast %146 : vector<1x1xf32> to vector<8x128xf32>
    %148 = vector.shape_cast %138 : vector<1x1xf32> to vector<1x1xf32>
    %149 = vector.broadcast %148 : vector<1x1xf32> to vector<8x128xf32>
    %150 = vector.shape_cast %145 : vector<1x1xf32> to vector<1x1xf32>
    %151 = vector.broadcast %150 : vector<1x1xf32> to vector<8x128xf32>
    %152 = tpu.concatenate %147, %149, %151 in 1 : vector<8x128xf32>, vector<8x128xf32>, vector<8x128xf32> -> vector<8x384xf32>
    %153 = vector.shape_cast %152 : vector<8x384xf32> to vector<1x8x384xf32>
    %c0_43 = arith.constant 0 : index
    %c0_44 = arith.constant 0 : index
    %c0_45 = arith.constant 0 : index
    %154 = vector.load %arg5[%c0_43, %c0_44, %c0_45] : memref<1x8x384xf32, #tpu.memory_space<vmem>>, vector<1x8x384xf32>
    tpu.vector_store %arg5[%c0_43, %c0_44, %c0_45], %153 {strides = array<i32>} : memref<1x8x384xf32, #tpu.memory_space<vmem>>, vector<1x8x384xf32>,
    return
  }
  func.func @transform_0(%arg0: i32) -> (i32, i32) {
    %c0_i32 = arith.constant 0 : i32
    %c0_i32_0 = arith.constant 0 : i32
    return %arg0, %c0_i32 : i32, i32
  }
  func.func @transform_1(%arg0: i32) -> (i32, i32) {
    %c0_i32 = arith.constant 0 : i32
    %c0_i32_0 = arith.constant 0 : i32
    return %arg0, %c0_i32 : i32, i32
  }
  func.func @transform_2(%arg0: i32) -> (i32, i32, i32) {
    %c0_i32 = arith.constant 0 : i32
    %c0_i32_0 = arith.constant 0 : i32
    %c0_i32_1 = arith.constant 0 : i32
    return %arg0, %c0_i32, %c0_i32_0 : i32, i32, i32
  }
  func.func @transform_3(%arg0: i32) -> (i32, i32, i32) {
    %c0_i32 = arith.constant 0 : i32
    %c0_i32_0 = arith.constant 0 : i32
    %c0_i32_1 = arith.constant 0 : i32
    return %arg0, %c0_i32, %c0_i32_0 : i32, i32, i32
  }
  func.func @transform_4(%arg0: i32) -> (i32, i32, i32) {
    %c0_i32 = arith.constant 0 : i32
    %c0_i32_0 = arith.constant 0 : i32
    %c0_i32_1 = arith.constant 0 : i32
    return %arg0, %c0_i32, %c0_i32_0 : i32, i32, i32
  }
}

</mosaic_0001>

<llo_original>
// kernel: _scale_sums_pallas.1
$region0: #{_scale_sums_pallas.1}
  #allocation0 [shape = 'u32[]', space=smem, size = 0x4, offset = 0x4, fixed_abs, tag = 'smem constant byte address 0x4 - core index']
  #allocation1 [shape = 'u32[144,128]{1,0:T(1,128)}', space=vmem, size = 0x12000, scoped, tag = 'internal scratch']
  %s0 = inlined_call_operand.hbm [shape: f32[272,256], index: 0, kind: input, shape index: {}]
  %s1 = inlined_call_operand.hbm [shape: f32[272,256], index: 1, kind: input, shape index: {}]
  %s2 = inlined_call_operand.vmem [shape: f32[5,1,256], index: 2, kind: input, shape index: {}]
  %s3 = inlined_call_operand.vmem [shape: f32[5,1,256], index: 3, kind: input, shape index: {}]
  %s4 = inlined_call_operand.vmem [shape: f32[5,8,384], index: 4, kind: output, shape index: {}]
  %s5 = sld [smem:[#allocation0]]
  $region57: #{_scale_sums_pallas.1} parent=0
    _
  %s7 = ssub.s32 1, %s5
  %s8 = scalar_select 0, %s7, %s5
  $region1: #{_scale_sums_pallas.1} parent=0
    #allocation2 [shape = 'u8[131072]{0}', space=vmem, size = 0x20000, scoped, tag = 'input window, operand 0']
    #allocation3 [shape = 's32[2]{0}', space=sflag, size = 0x8, scoped, tag = 'scoped memory for _scale_sums_pallas.1']
    #allocation4 [shape = 'u8[131072]{0}', space=vmem, size = 0x20000, scoped, tag = 'input window, operand 1']
    #allocation5 [shape = 's32[2]{0}', space=sflag, size = 0x8, scoped, tag = 'scoped memory for _scale_sums_pallas.1']
    %9 = vsyncpa [#allocation3], 0
    %s10 = scalar_lea.sflag [#allocation3], 1
    %11 = vsyncpa %s10, 0
    %12 = vsyncpa [#allocation5], 0
    %s13 = scalar_lea.sflag [#allocation5], 1
    %14 = vsyncpa %s13, 0
    loop: start=0, step=1, limit=7
    $region2: #{_scale_sums_pallas.1} parent=1 // loop_pre_header
      _
    $region3: #{_scale_sums_pallas.1} parent=1 // loop_header
      %s16 = sphi 0, %s20
      %p17 = scmp.ge.s32.totalorder %s16, 7
      %s26 = sphi 0, %s28
      %s29 = sphi 0, %s26
      %s30 = sphi 0, %s29
      %s46 = sphi 0, %s30
      %s52 = sphi 0, %s54
      %s55 = sphi 0, %s52
      %s56 = sphi 0, %s55
      %s72 = sphi 0, %s56
      %s78 = sphi 0, %s80
      %s81 = sphi 0, %s78
      %s82 = sphi 0, %s81
      %s98 = sphi 0, %s82
      %s104 = sphi 0, %s106
      %s107 = sphi 0, %s104
      %s108 = sphi 0, %s107
      %s124 = sphi 0, %s108
      %s130 = sphi 0, %s132
      %s133 = sphi 0, %s130
      %s134 = sphi 0, %s133
      %s150 = sphi 0, %s134
    $region4: #{_scale_sums_pallas.1} parent=1 // loop_header_branch
      %19 = sbr.rel (%p17) target = $region8
    $region5: #{_scale_sums_pallas.1} parent=1 // loop_body
      %s21 = ssub.s32 %s16, 1
      %s22 = ssub.s32 %s16, 2
      %s23 = sadd.s32 %s16, 1
      %s24 = ssub.s32 %s16, %s23
      %p25 = scmp.eq.s32.totalorder %s24, 0
      %s27 = sadd.s32 %s26, 1
      %s28 = scalar_select %p25, %s26, %s27
      %p31 = pneg %p25
      %p32 = scmp.eq.s32.totalorder %s16, 4
      %p33 = por %p31, %p32
      %p34 = scmp.ne.s32.totalorder %s26, %s29
      %p35 = scmp.eq.s32.totalorder %s16, 0
      %p36 = por %p34, %p35
      %p37 = scmp.ne.s32.totalorder %s26, %s29
      %p38 = scmp.eq.s32.totalorder %s21, 4
      %p39 = por %p37, %p38
      %p40 = scmp.ne.s32.totalorder %s29, %s30
      %p41 = scmp.eq.s32.totalorder %s21, 0
      %p42 = por %p40, %p41
      %p43 = scmp.ne.s32.totalorder %s29, %s30
      %p44 = scmp.eq.s32.totalorder %s22, 4
      %p45 = por %p43, %p44
      %p47 = scmp.ne.s32.totalorder %s30, %s46
      %p48 = scmp.eq.s32.totalorder %s22, 0
      %p49 = por %p47, %p48
      %s50 = ssub.s32 %s16, %s23
      %p51 = scmp.eq.s32.totalorder %s50, 0
      %s53 = sadd.s32 %s52, 1
      %s54 = scalar_select %p51, %s52, %s53
      %p57 = pneg %p51
      %p58 = scmp.eq.s32.totalorder %s16, 4
      %p59 = por %p57, %p58
      %p60 = scmp.ne.s32.totalorder %s52, %s55
      %p61 = scmp.eq.s32.totalorder %s16, 0
      %p62 = por %p60, %p61
      %p63 = scmp.ne.s32.totalorder %s52, %s55
      %p64 = scmp.eq.s32.totalorder %s21, 4
      %p65 = por %p63, %p64
      %p66 = scmp.ne.s32.totalorder %s55, %s56
      %p67 = scmp.eq.s32.totalorder %s21, 0
      %p68 = por %p66, %p67
      %p69 = scmp.ne.s32.totalorder %s55, %s56
      %p70 = scmp.eq.s32.totalorder %s22, 4
      %p71 = por %p69, %p70
      %p73 = scmp.ne.s32.totalorder %s56, %s72
      %p74 = scmp.eq.s32.totalorder %s22, 0
      %p75 = por %p73, %p74
      %s76 = ssub.s32 %s16, %s23
      %p77 = scmp.eq.s32.totalorder %s76, 0
      %s79 = sadd.s32 %s78, 1
      %s80 = scalar_select %p77, %s78, %s79
      %p83 = pneg %p77
      %p84 = scmp.eq.s32.totalorder %s16, 4
      %p85 = por %p83, %p84
      %p86 = scmp.ne.s32.totalorder %s78, %s81
      %p87 = scmp.eq.s32.totalorder %s16, 0
      %p88 = por %p86, %p87
      %p89 = scmp.ne.s32.totalorder %s78, %s81
      %p90 = scmp.eq.s32.totalorder %s21, 4
      %p91 = por %p89, %p90
      %p92 = scmp.ne.s32.totalorder %s81, %s82
      %p93 = scmp.eq.s32.totalorder %s21, 0
      %p94 = por %p92, %p93
      %p95 = scmp.ne.s32.totalorder %s81, %s82
      %p96 = scmp.eq.s32.totalorder %s22, 4
      %p97 = por %p95, %p96
      %p99 = scmp.ne.s32.totalorder %s82, %s98
      %p100 = scmp.eq.s32.totalorder %s22, 0
      %p101 = por %p99, %p100
      %s102 = ssub.s32 %s16, %s23
      %p103 = scmp.eq.s32.totalorder %s102, 0
      %s105 = sadd.s32 %s104, 1
      %s106 = scalar_select %p103, %s104, %s105
      %p109 = pneg %p103
      %p110 = scmp.eq.s32.totalorder %s16, 4
      %p111 = por %p109, %p110
      %p112 = scmp.ne.s32.totalorder %s104, %s107
      %p113 = scmp.eq.s32.totalorder %s16, 0
      %p114 = por %p112, %p113
      %p115 = scmp.ne.s32.totalorder %s104, %s107
      %p116 = scmp.eq.s32.totalorder %s21, 4
      %p117 = por %p115, %p116
      %p118 = scmp.ne.s32.totalorder %s107, %s108
      %p119 = scmp.eq.s32.totalorder %s21, 0
      %p120 = por %p118, %p119
      %p121 = scmp.ne.s32.totalorder %s107, %s108
      %p122 = scmp.eq.s32.totalorder %s22, 4
      %p123 = por %p121, %p122
      %p125 = scmp.ne.s32.totalorder %s108, %s124
      %p126 = scmp.eq.s32.totalorder %s22, 0
      %p127 = por %p125, %p126
      %s128 = ssub.s32 %s16, %s23
      %p129 = scmp.eq.s32.totalorder %s128, 0
      %s131 = sadd.s32 %s130, 1
      %s132 = scalar_select %p129, %s130, %s131
      %p135 = pneg %p129
      %p136 = scmp.eq.s32.totalorder %s16, 4
      %p137 = por %p135, %p136
      %p138 = scmp.ne.s32.totalorder %s130, %s133
      %p139 = scmp.eq.s32.totalorder %s16, 0
      %p140 = por %p138, %p139
      %p141 = scmp.ne.s32.totalorder %s130, %s133
      %p142 = scmp.eq.s32.totalorder %s21, 4
      %p143 = por %p141, %p142
      %p144 = scmp.ne.s32.totalorder %s133, %s134
      %p145 = scmp.eq.s32.totalorder %s21, 0
      %p146 = por %p144, %p145
      %p147 = scmp.ne.s32.totalorder %s133, %s134
      %p148 = scmp.eq.s32.totalorder %s22, 4
      %p149 = por %p147, %p148
      %p151 = scmp.ne.s32.totalorder %s134, %s150
      %p152 = scmp.eq.s32.totalorder %s22, 0
      %p153 = por %p151, %p152
      %p154 = scmp.le.s32.totalorder 1, %s16
      %p155 = scmp.lt.s32.totalorder %s16, 6
      %p156 = pnand %p154, %p155
      %p157 = pneg %p156
      // Predicated region
      $region9: #{_scale_sums_pallas.1} parent=5 // pred_check
        _
      $region10: #{_scale_sums_pallas.1} parent=5 // pred_check_branch
        %159 = sbr.rel (%p156) target = $region12
      $region11: #{_scale_sums_pallas.1} parent=5 // pred_region
        %s160 = ssub.s32 %s16, 1
      $region12: #{_scale_sums_pallas.1} parent=5 // pred_fallthru
        _
      %p161 = scmp.lt.s32.totalorder %s16, 5
      // Predicated region
      $region13: #{_scale_sums_pallas.1} parent=5 // pred_check
        %p162 = pneg %p161
      $region14: #{_scale_sums_pallas.1} parent=5 // pred_check_branch
        %164 = sbr.rel (%p162) target = $region16
      $region15: #{_scale_sums_pallas.1} parent=5 // pred_region
        // Predicated region
        $region17: #{_scale_sums_pallas.1} parent=15 // pred_check
          %p165 = pneg %p36
        $region18: #{_scale_sums_pallas.1} parent=15 // pred_check_branch
          %167 = sbr.rel (%p165) target = $region20
        $region19: #{_scale_sums_pallas.1} parent=15 // pred_region
          %s168 = sand.u32 %s26, 1
          %s169 = scalar_lea.sflag [#allocation3], %s168
          %s170 = sand.u32 %s26, 1
          %s171 = smul.addr %s170, 128
          %s172 = scalar_lea.vmem [#allocation2], %s171
          %s173 = smul.u32 8, %s16
          %s174 = ssub.s32 34, %s173
          %p175 = scmp.lt.s32.totalorder %s174, 8
          %s176 = scalar_select %p175, %s174, 8
          %s177 = smul.u32 128, %s176
          %s178 = smul.u32 %s177, 2
          %s180 = ssub.s32 2048, %s178
          %181 = vsyncadd %s169, %s180
          %p182 = scmp.ne.s32.totalorder 0, %s178
          %s183 = smul.addr %s173, 2
          %s184 = smul.addr %s183, 128
          %s185 = scalar_lea.hbm %s0, %s184
          %s186 = smul.u32 16, %s176
          %s187 = sshll.u32 %s172, 4
          %s188 = int_to_ptr.vmem [resolvable:$true] %s187
          %s189 = sshll.u32 %s186, 4
          %193 = dma.hbm_to_vmem [thread:$0]  (%p182), %s185, %s189, %s188, %s169, 256, 256, 16
        $region20: #{_scale_sums_pallas.1} parent=15 // pred_fallthru
          _
        // Predicated region
        $region21: #{_scale_sums_pallas.1} parent=15 // pred_check
          %p194 = pneg %p62
        $region22: #{_scale_sums_pallas.1} parent=15 // pred_check_branch
          %196 = sbr.rel (%p194) target = $region24
        $region23: #{_scale_sums_pallas.1} parent=15 // pred_region
          %s197 = sand.u32 %s52, 1
          %s198 = scalar_lea.sflag [#allocation5], %s197
          %s199 = sand.u32 %s52, 1
          %s200 = smul.addr %s199, 128
          %s201 = scalar_lea.vmem [#allocation4], %s200
          %s202 = smul.u32 8, %s16
          %s203 = ssub.s32 34, %s202
          %p204 = scmp.lt.s32.totalorder %s203, 8
          %s205 = scalar_select %p204, %s203, 8
          %s206 = smul.u32 128, %s205
          %s207 = smul.u32 %s206, 2
          %s209 = ssub.s32 2048, %s207
          %210 = vsyncadd %s198, %s209
          %p211 = scmp.ne.s32.totalorder 0, %s207
          %s212 = smul.addr %s202, 2
          %s213 = smul.addr %s212, 128
          %s214 = scalar_lea.hbm %s1, %s213
          %s215 = smul.u32 16, %s205
          %s216 = sshll.u32 %s201, 4
          %s217 = int_to_ptr.vmem [resolvable:$true] %s216
          %s218 = sshll.u32 %s215, 4
          %222 = dma.hbm_to_vmem [thread:$0]  (%p211), %s214, %s218, %s217, %s198, 256, 256, 16
        $region24: #{_scale_sums_pallas.1} parent=15 // pred_fallthru
          _
        // Predicated region
        $region25: #{_scale_sums_pallas.1} parent=15 // pred_check
          %p223 = pneg %p88
        $region26: #{_scale_sums_pallas.1} parent=15 // pred_check_branch
          %225 = sbr.rel (%p223) target = $region28
        $region27: #{_scale_sums_pallas.1} parent=15 // pred_region
          %p226 = scmp.lt.s32.totalorder %s16, 4
          %s227 = scalar_select %p226, %s16, 4
          %s228 = smul.addr %s227, 2
          %s229 = scalar_lea.vmem %s2, %s228
        $region28: #{_scale_sums_pallas.1} parent=15 // pred_fallthru
          _
        // Predicated region
        $region29: #{_scale_sums_pallas.1} parent=15 // pred_check
          %p230 = pneg %p114
        $region30: #{_scale_sums_pallas.1} parent=15 // pred_check_branch
          %232 = sbr.rel (%p230) target = $region32
        $region31: #{_scale_sums_pallas.1} parent=15 // pred_region
          %p233 = scmp.lt.s32.totalorder %s16, 4
          %s234 = scalar_select %p233, %s16, 4
          %s235 = smul.addr %s234, 2
          %s236 = scalar_lea.vmem %s3, %s235
        $region32: #{_scale_sums_pallas.1} parent=15 // pred_fallthru
          _
      $region16: #{_scale_sums_pallas.1} parent=5 // pred_fallthru
        _
      %p237 = scmp.le.s32.totalorder 1, %s16
      %p238 = scmp.lt.s32.totalorder %s16, 6
      %p239 = pnand %p237, %p238
      %p240 = pneg %p239
      // Predicated region
      $region33: #{_scale_sums_pallas.1} parent=5 // pred_check
        _
      $region34: #{_scale_sums_pallas.1} parent=5 // pred_check_branch
        %242 = sbr.rel (%p239) target = $region36
      $region35: #{_scale_sums_pallas.1} parent=5 // pred_region
        %s243 = ssub.s32 %s16, 1
        %s244 = sand.u32 %s29, 1
        %s245 = scalar_lea.sflag [#allocation3], %s244
        %s246 = sand.u32 %s29, 1
        %s247 = smul.addr %s246, 128
        %s248 = scalar_lea.vmem [#allocation2], %s247
        // Predicated region
        $region37: #{_scale_sums_pallas.1} parent=35 // pred_check
          %p249 = pneg %p42
        $region38: #{_scale_sums_pallas.1} parent=35 // pred_check_branch
          %251 = sbr.rel (%p249) target = $region40
        $region39: #{_scale_sums_pallas.1} parent=35 // pred_region
          %252 = dma.done %s245, 2048
        $region40: #{_scale_sums_pallas.1} parent=35 // pred_fallthru
          _
        %s253 = sand.u32 %s55, 1
        %s254 = scalar_lea.sflag [#allocation5], %s253
        %s255 = sand.u32 %s55, 1
        %s256 = smul.addr %s255, 128
        %s257 = scalar_lea.vmem [#allocation4], %s256
        // Predicated region
        $region41: #{_scale_sums_pallas.1} parent=35 // pred_check
          %p258 = pneg %p68
        $region42: #{_scale_sums_pallas.1} parent=35 // pred_check_branch
          %260 = sbr.rel (%p258) target = $region44
        $region43: #{_scale_sums_pallas.1} parent=35 // pred_region
          %261 = dma.done %s254, 2048
        $region44: #{_scale_sums_pallas.1} parent=35 // pred_fallthru
          _
        %s262 = sand.u32 %s29, 1
        %s263 = scalar_lea.sflag [#allocation3], %s262
        %s264 = sand.u32 %s29, 1
        %s265 = smul.addr %s264, 128
        %s266 = scalar_lea.vmem [#allocation2], %s265
        %p267 = pneg %p42
        %p268 = pneg %p39
        %s269 = sand.u32 %s55, 1
        %s270 = scalar_lea.sflag [#allocation5], %s269
        %s271 = sand.u32 %s55, 1
        %s272 = smul.addr %s271, 128
        %s273 = scalar_lea.vmem [#allocation4], %s272
        %p274 = pneg %p68
        %p275 = pneg %p65
        %p276 = scmp.lt.s32.totalorder %s21, 4
        %s277 = scalar_select %p276, %s21, 4
        %s278 = smul.addr %s277, 2
        %s279 = scalar_lea.vmem %s2, %s278
        %p280 = pneg %p94
        %p281 = pneg %p91
        %p282 = scmp.lt.s32.totalorder %s21, 4
        %s283 = scalar_select %p282, %s21, 4
        %s284 = smul.addr %s283, 2
        %s285 = scalar_lea.vmem %s3, %s284
        %p286 = pneg %p120
        %p287 = pneg %p117
        %p288 = pneg %p146
        %p289 = pneg %p143
        %p290 = scmp.lt.s32.totalorder %s21, 4
        %s291 = scalar_select %p290, %s21, 4
        %s292 = smul.addr %s291, 3
        %s293 = smul.addr %s292, 8
        %s294 = scalar_lea.vmem %s4, %s293
        %s295 = smul.u32 8, %s21
        %s296 = ssub.s32 34, %s295
        %p297 = scmp.lt.s32.totalorder %s296, 8
        %s298 = scalar_select %p297, %s296, 8
        %s299 = smul.u32 128, %s298
        %s300 = smul.u32 %s299, 2
        %s301 = smul.u32 8, %s21
        %s302 = ssub.s32 34, %s301
        %p303 = scmp.lt.s32.totalorder %s302, 8
        %s304 = scalar_select %p303, %s302, 8
        %s305 = smul.u32 128, %s304
        %s306 = smul.u32 %s305, 2
        %p307 = scmp.lt.s32.totalorder %s21, 4
        %s308 = scalar_select %p307, %s21, 4
        %s309 = smul.addr %s308, 2
        %s310 = scalar_lea.vmem %s2, %s309
        %p311 = scmp.lt.s32.totalorder %s21, 4
        %s312 = scalar_select %p311, %s21, 4
        %s313 = smul.addr %s312, 2
        %s314 = scalar_lea.vmem %s3, %s313
        %p315 = scmp.lt.s32.totalorder %s21, 4
        %s316 = scalar_select %p315, %s21, 4
        %s317 = smul.addr %s316, 3
        %s318 = smul.addr %s317, 8
        %s319 = scalar_lea.vmem %s4, %s318
        %v320 = vld [vmem:[%s248] sm:$0xff]
        %v321 = vld [vmem:[%s248 + $0x8] sm:$0xff]
        %v322 = vld [vmem:[%s248 + $0x10] sm:$0xff]
        %v323 = vld [vmem:[%s248 + $0x18] sm:$0xff]
        %v324 = vld [vmem:[%s248 + $0x20] sm:$0xff]
        %v325 = vld [vmem:[%s248 + $0x28] sm:$0xff]
        %v326 = vld [vmem:[%s248 + $0x30] sm:$0xff]
        %v327 = vld [vmem:[%s248 + $0x38] sm:$0xff]
        %v328 = vld [vmem:[%s248 + $0x40] sm:$0xff]
        %v329 = vld [vmem:[%s248 + $0x48] sm:$0xff]
        %v330 = vld [vmem:[%s248 + $0x50] sm:$0xff]
        %v331 = vld [vmem:[%s248 + $0x58] sm:$0xff]
        %v332 = vld [vmem:[%s248 + $0x60] sm:$0xff]
        %v333 = vld [vmem:[%s248 + $0x68] sm:$0xff]
        %v334 = vld [vmem:[%s248 + $0x70] sm:$0xff]
        %v335 = vld [vmem:[%s248 + $0x78] sm:$0xff]
        %v336 = vld [vmem:[%s257] sm:$0xff]
        %v337 = vld [vmem:[%s257 + $0x8] sm:$0xff]
        %v338 = vld [vmem:[%s257 + $0x10] sm:$0xff]
        %v339 = vld [vmem:[%s257 + $0x18] sm:$0xff]
        %v340 = vld [vmem:[%s257 + $0x20] sm:$0xff]
        %v341 = vld [vmem:[%s257 + $0x28] sm:$0xff]
        %v342 = vld [vmem:[%s257 + $0x30] sm:$0xff]
        %v343 = vld [vmem:[%s257 + $0x38] sm:$0xff]
        %v344 = vld [vmem:[%s257 + $0x40] sm:$0xff]
        %v345 = vld [vmem:[%s257 + $0x48] sm:$0xff]
        %v346 = vld [vmem:[%s257 + $0x50] sm:$0xff]
        %v347 = vld [vmem:[%s257 + $0x58] sm:$0xff]
        %v348 = vld [vmem:[%s257 + $0x60] sm:$0xff]
        %v349 = vld [vmem:[%s257 + $0x68] sm:$0xff]
        %v350 = vld [vmem:[%s257 + $0x70] sm:$0xff]
        %v351 = vld [vmem:[%s257 + $0x78] sm:$0xff]
        %v352 = vlaneseq
        %v353 = vshrl.u32 %v352, 7
        %v354 = vadd.s32 %v353, 8
        %v355 = vadd.s32 %v353, 16
        %v356 = vadd.s32 %v353, 24
        %v357 = vadd.s32 %v353, 32
        %v358 = vadd.s32 %v353, 40
        %v359 = vadd.s32 %v353, 48
        %v360 = vadd.s32 %v353, 56
        %v361 = vlaneseq
        %v362 = vand.u32 %v361, 127
        %v363 = vadd.s32 %v362, 128
        %vm364 = vcmp.eq.s32.totalorder %v353, 0
        %vm365 = vcmp.eq.s32.totalorder %v354, 0
        %vm366 = vcmp.eq.s32.totalorder %v355, 0
        %vm367 = vcmp.eq.s32.totalorder %v356, 0
        %vm368 = vcmp.eq.s32.totalorder %v357, 0
        %vm369 = vcmp.eq.s32.totalorder %v358, 0
        %vm370 = vcmp.eq.s32.totalorder %v359, 0
        %vm371 = vcmp.eq.s32.totalorder %v360, 0
        %372 = vrot.lane.b32.xlu0 %v320, 1
        %v373 = vpop.permute.xlu0 %372
        %374 = vrot.lane.b32.xlu0 %v322, 1
        %v375 = vpop.permute.xlu0 %374
        %376 = vrot.lane.b32.xlu0 %v324, 1
        %v377 = vpop.permute.xlu0 %376
        %378 = vrot.lane.b32.xlu0 %v326, 1
        %v379 = vpop.permute.xlu0 %378
        %380 = vrot.lane.b32.xlu0 %v328, 1
        %v381 = vpop.permute.xlu0 %380
        %382 = vrot.lane.b32.xlu0 %v330, 1
        %v383 = vpop.permute.xlu0 %382
        %384 = vrot.lane.b32.xlu0 %v332, 1
        %v385 = vpop.permute.xlu0 %384
        %386 = vrot.lane.b32.xlu0 %v334, 1
        %v387 = vpop.permute.xlu0 %386
        %388 = vrot.lane.b32.xlu0 %v321, 1
        %v389 = vpop.permute.xlu0 %388
        %390 = vrot.lane.b32.xlu0 %v323, 1
        %v391 = vpop.permute.xlu0 %390
        %392 = vrot.lane.b32.xlu0 %v325, 1
        %v393 = vpop.permute.xlu0 %392
        %394 = vrot.lane.b32.xlu0 %v327, 1
        %v395 = vpop.permute.xlu0 %394
        %396 = vrot.lane.b32.xlu0 %v329, 1
        %v397 = vpop.permute.xlu0 %396
        %398 = vrot.lane.b32.xlu0 %v331, 1
        %v399 = vpop.permute.xlu0 %398
        %400 = vrot.lane.b32.xlu0 %v333, 1
        %v401 = vpop.permute.xlu0 %400
        %402 = vrot.lane.b32.xlu0 %v335, 1
        %v403 = vpop.permute.xlu0 %402
        %vm404 = vcmp.lt.s32.totalorder %v362, 1
        %v405 = vsel %vm404, %v373, %v389
        %v406 = vsel %vm404, %v375, %v391
        %v407 = vsel %vm404, %v377, %v393
        %v408 = vsel %vm404, %v379, %v395
        %v409 = vsel %vm404, %v381, %v397
        %v410 = vsel %vm404, %v383, %v399
        %v411 = vsel %vm404, %v385, %v401
        %v412 = vsel %vm404, %v387, %v403
        %v413 = vsel %vm404, %v389, %v373
        %v414 = vsel %vm404, %v391, %v375
        %v415 = vsel %vm404, %v393, %v377
        %v416 = vsel %vm404, %v395, %v379
        %v417 = vsel %vm404, %v397, %v381
        %v418 = vsel %vm404, %v399, %v383
        %v419 = vsel %vm404, %v401, %v385
        %v420 = vsel %vm404, %v403, %v387
        %v421 = vld [vmem:[%s310] sm:$0x3]
        %v422 = vrot.slane %v320, 7
        %v423 = vrot.slane %v321, 7
        %v424 = vrot.slane %v322, 7
        %v425 = vrot.slane %v323, 7
        %v426 = vrot.slane %v324, 7
        %v427 = vrot.slane %v325, 7
        %v428 = vrot.slane %v326, 7
        %v429 = vrot.slane %v327, 7
        %v430 = vrot.slane %v328, 7
        %v431 = vrot.slane %v329, 7
        %v432 = vrot.slane %v330, 7
        %v433 = vrot.slane %v331, 7
        %v434 = vrot.slane %v332, 7
        %v435 = vrot.slane %v333, 7
        %v436 = vrot.slane %v334, 7
        %v437 = vrot.slane %v335, 7
        %vm438 = vcmp.lt.s32.totalorder %v353, 1
        %v439 = vsel %vm438, %v434, %v436
        %v440 = vsel %vm438, %v435, %v437
        %v441 = vsel %vm438, %v432, %v434
        %v442 = vsel %vm438, %v433, %v435
        %v443 = vsel %vm438, %v430, %v432
        %v444 = vsel %vm438, %v431, %v433
        %v445 = vsel %vm438, %v428, %v430
        %v446 = vsel %vm438, %v429, %v431
        %v447 = vsel %vm438, %v426, %v428
        %v448 = vsel %vm438, %v427, %v429
        %v449 = vsel %vm438, %v424, %v426
        %v450 = vsel %vm438, %v425, %v427
        %v451 = vsel %vm438, %v422, %v424
        %v452 = vsel %vm438, %v423, %v425
        %v453 = vsel %vm438, %v436, %v422
        %v454 = vsel %vm438, %v437, %v423
        %v456 = vlaneseq
        %v457 = vshrl.u32 %v456, 7
        %v458 = vsub.s32 0, %v457
        %v459 = vrot.slane %v421, %v458
        %v460 = vlaneseq
        %v461 = vshrl.u32 %v460, 7
        %v462 = vsub.s32 1, %v461
        %v463 = vrot.slane %v421, %v462
        %v466 = vsel %vm364, %v459, %v453
        %v467 = vsel %vm364, %v463, %v454
        %v468 = vsel %vm365, %v459, %v451
        %v469 = vsel %vm365, %v463, %v452
        %v470 = vsel %vm366, %v459, %v449
        %v471 = vsel %vm366, %v463, %v450
        %v472 = vsel %vm367, %v459, %v447
        %v473 = vsel %vm367, %v463, %v448
        %v474 = vsel %vm368, %v459, %v445
        %v475 = vsel %vm368, %v463, %v446
        %v476 = vsel %vm369, %v459, %v443
        %v477 = vsel %vm369, %v463, %v444
        %v478 = vsel %vm370, %v459, %v441
        %v479 = vsel %vm370, %v463, %v442
        %v480 = vsel %vm371, %v459, %v439
        %v481 = vsel %vm371, %v463, %v440
        %v482 = vsub.f32 %v320, %v413
        %v483 = vsub.f32 %v321, %v405
        %v484 = vsub.f32 %v322, %v414
        %v485 = vsub.f32 %v323, %v406
        %v486 = vsub.f32 %v324, %v415
        %v487 = vsub.f32 %v325, %v407
        %v488 = vsub.f32 %v326, %v416
        %v489 = vsub.f32 %v327, %v408
        %v490 = vsub.f32 %v328, %v417
        %v491 = vsub.f32 %v329, %v409
        %v492 = vsub.f32 %v330, %v418
        %v493 = vsub.f32 %v331, %v410
        %v494 = vsub.f32 %v332, %v419
        %v495 = vsub.f32 %v333, %v411
        %v496 = vsub.f32 %v334, %v420
        %v497 = vsub.f32 %v335, %v412
        %v498 = vsub.f32 %v320, %v466
        %v499 = vsub.f32 %v321, %v467
        %v500 = vsub.f32 %v322, %v468
        %v501 = vsub.f32 %v323, %v469
        %v502 = vsub.f32 %v324, %v470
        %v503 = vsub.f32 %v325, %v471
        %v504 = vsub.f32 %v326, %v472
        %v505 = vsub.f32 %v327, %v473
        %v506 = vsub.f32 %v328, %v474
        %v507 = vsub.f32 %v329, %v475
        %v508 = vsub.f32 %v330, %v476
        %v509 = vsub.f32 %v331, %v477
        %v510 = vsub.f32 %v332, %v478
        %v511 = vsub.f32 %v333, %v479
        %v512 = vsub.f32 %v334, %v480
        %v513 = vsub.f32 %v335, %v481
        %514 = vrot.lane.b32.xlu0 %v336, 1
        %v515 = vpop.permute.xlu0 %514
        %516 = vrot.lane.b32.xlu0 %v338, 1
        %v517 = vpop.permute.xlu0 %516
        %518 = vrot.lane.b32.xlu0 %v340, 1
        %v519 = vpop.permute.xlu0 %518
        %520 = vrot.lane.b32.xlu0 %v342, 1
        %v521 = vpop.permute.xlu0 %520
        %522 = vrot.lane.b32.xlu0 %v344, 1
        %v523 = vpop.permute.xlu0 %522
        %524 = vrot.lane.b32.xlu0 %v346, 1
        %v525 = vpop.permute.xlu0 %524
        %526 = vrot.lane.b32.xlu0 %v348, 1
        %v527 = vpop.permute.xlu0 %526
        %528 = vrot.lane.b32.xlu0 %v350, 1
        %v529 = vpop.permute.xlu0 %528
        %530 = vrot.lane.b32.xlu0 %v337, 1
        %v531 = vpop.permute.xlu0 %530
        %532 = vrot.lane.b32.xlu0 %v339, 1
        %v533 = vpop.permute.xlu0 %532
        %534 = vrot.lane.b32.xlu0 %v341, 1
        %v535 = vpop.permute.xlu0 %534
        %536 = vrot.lane.b32.xlu0 %v343, 1
        %v537 = vpop.permute.xlu0 %536
        %538 = vrot.lane.b32.xlu0 %v345, 1
        %v539 = vpop.permute.xlu0 %538
        %540 = vrot.lane.b32.xlu0 %v347, 1
        %v541 = vpop.permute.xlu0 %540
        %542 = vrot.lane.b32.xlu0 %v349, 1
        %v543 = vpop.permute.xlu0 %542
        %544 = vrot.lane.b32.xlu0 %v351, 1
        %v545 = vpop.permute.xlu0 %544
        %v546 = vsel %vm404, %v515, %v531
        %v547 = vsel %vm404, %v517, %v533
        %v548 = vsel %vm404, %v519, %v535
        %v549 = vsel %vm404, %v521, %v537
        %v550 = vsel %vm404, %v523, %v539
        %v551 = vsel %vm404, %v525, %v541
        %v552 = vsel %vm404, %v527, %v543
        %v553 = vsel %vm404, %v529, %v545
        %v554 = vsel %vm404, %v531, %v515
        %v555 = vsel %vm404, %v533, %v517
        %v556 = vsel %vm404, %v535, %v519
        %v557 = vsel %vm404, %v537, %v521
        %v558 = vsel %vm404, %v539, %v523
        %v559 = vsel %vm404, %v541, %v525
        %v560 = vsel %vm404, %v543, %v527
        %v561 = vsel %vm404, %v545, %v529
        %v562 = vld [vmem:[%s314] sm:$0x3]
        %v563 = vrot.slane %v336, 7
        %v564 = vrot.slane %v337, 7
        %v565 = vrot.slane %v338, 7
        %v566 = vrot.slane %v339, 7
        %v567 = vrot.slane %v340, 7
        %v568 = vrot.slane %v341, 7
        %v569 = vrot.slane %v342, 7
        %v570 = vrot.slane %v343, 7
        %v571 = vrot.slane %v344, 7
        %v572 = vrot.slane %v345, 7
        %v573 = vrot.slane %v346, 7
        %v574 = vrot.slane %v347, 7
        %v575 = vrot.slane %v348, 7
        %v576 = vrot.slane %v349, 7
        %v577 = vrot.slane %v350, 7
        %v578 = vrot.slane %v351, 7
        %v579 = vsel %vm438, %v575, %v577
        %v580 = vsel %vm438, %v576, %v578
        %v581 = vsel %vm438, %v573, %v575
        %v582 = vsel %vm438, %v574, %v576
        %v583 = vsel %vm438, %v571, %v573
        %v584 = vsel %vm438, %v572, %v574
        %v585 = vsel %vm438, %v569, %v571
        %v586 = vsel %vm438, %v570, %v572
        %v587 = vsel %vm438, %v567, %v569
        %v588 = vsel %vm438, %v568, %v570
        %v589 = vsel %vm438, %v565, %v567
        %v590 = vsel %vm438, %v566, %v568
        %v591 = vsel %vm438, %v563, %v565
        %v592 = vsel %vm438, %v564, %v566
        %v593 = vsel %vm438, %v577, %v563
        %v594 = vsel %vm438, %v578, %v564
        %v596 = vlaneseq
        %v597 = vshrl.u32 %v596, 7
        %v598 = vsub.s32 0, %v597
        %v599 = vrot.slane %v562, %v598
        %v600 = vlaneseq
        %v601 = vshrl.u32 %v600, 7
        %v602 = vsub.s32 1, %v601
        %v603 = vrot.slane %v562, %v602
        %v606 = vsel %vm364, %v599, %v593
        %v607 = vsel %vm364, %v603, %v594
        %v608 = vsel %vm365, %v599, %v591
        %v609 = vsel %vm365, %v603, %v592
        %v610 = vsel %vm366, %v599, %v589
        %v611 = vsel %vm366, %v603, %v590
        %v612 = vsel %vm367, %v599, %v587
        %v613 = vsel %vm367, %v603, %v588
        %v614 = vsel %vm368, %v599, %v585
        %v615 = vsel %vm368, %v603, %v586
        %v616 = vsel %vm369, %v599, %v583
        %v617 = vsel %vm369, %v603, %v584
        %v618 = vsel %vm370, %v599, %v581
        %v619 = vsel %vm370, %v603, %v582
        %v620 = vsel %vm371, %v599, %v579
        %v621 = vsel %vm371, %v603, %v580
        %v622 = vsub.f32 %v336, %v554
        %v623 = vsub.f32 %v337, %v546
        %v624 = vsub.f32 %v338, %v555
        %v625 = vsub.f32 %v339, %v547
        %v626 = vsub.f32 %v340, %v556
        %v627 = vsub.f32 %v341, %v548
        %v628 = vsub.f32 %v342, %v557
        %v629 = vsub.f32 %v343, %v549
        %v630 = vsub.f32 %v344, %v558
        %v631 = vsub.f32 %v345, %v550
        %v632 = vsub.f32 %v346, %v559
        %v633 = vsub.f32 %v347, %v551
        %v634 = vsub.f32 %v348, %v560
        %v635 = vsub.f32 %v349, %v552
        %v636 = vsub.f32 %v350, %v561
        %v637 = vsub.f32 %v351, %v553
        %v638 = vsub.f32 %v336, %v606
        %v639 = vsub.f32 %v337, %v607
        %v640 = vsub.f32 %v338, %v608
        %v641 = vsub.f32 %v339, %v609
        %v642 = vsub.f32 %v340, %v610
        %v643 = vsub.f32 %v341, %v611
        %v644 = vsub.f32 %v342, %v612
        %v645 = vsub.f32 %v343, %v613
        %v646 = vsub.f32 %v344, %v614
        %v647 = vsub.f32 %v345, %v615
        %v648 = vsub.f32 %v346, %v616
        %v649 = vsub.f32 %v347, %v617
        %v650 = vsub.f32 %v348, %v618
        %v651 = vsub.f32 %v349, %v619
        %v652 = vsub.f32 %v350, %v620
        %v653 = vsub.f32 %v351, %v621
        %p654 = scmp.eq.s32.totalorder %s21, 0
        %s655 = scalar_select %p654, 1, 0
        %s656 = smul.u32 %s21, 64
        %s657 = ssub.s32 272, %s656
        %vm658 = vcmp.gt.f32.partialorder %v336, 0.0
        %vm659 = vcmp.gt.f32.partialorder %v337, 0.0
        %vm660 = vcmp.gt.f32.partialorder %v338, 0.0
        %vm661 = vcmp.gt.f32.partialorder %v339, 0.0
        %vm662 = vcmp.gt.f32.partialorder %v340, 0.0
        %vm663 = vcmp.gt.f32.partialorder %v341, 0.0
        %vm664 = vcmp.gt.f32.partialorder %v342, 0.0
        %vm665 = vcmp.gt.f32.partialorder %v343, 0.0
        %vm666 = vcmp.gt.f32.partialorder %v344, 0.0
        %vm667 = vcmp.gt.f32.partialorder %v345, 0.0
        %vm668 = vcmp.gt.f32.partialorder %v346, 0.0
        %vm669 = vcmp.gt.f32.partialorder %v347, 0.0
        %vm670 = vcmp.gt.f32.partialorder %v348, 0.0
        %vm671 = vcmp.gt.f32.partialorder %v349, 0.0
        %vm672 = vcmp.gt.f32.partialorder %v350, 0.0
        %vm673 = vcmp.gt.f32.partialorder %v351, 0.0
        %vm674 = vcmp.gt.f32.partialorder %v554, 0.0
        %vm675 = vcmp.gt.f32.partialorder %v546, 0.0
        %vm676 = vcmp.gt.f32.partialorder %v555, 0.0
        %vm677 = vcmp.gt.f32.partialorder %v547, 0.0
        %vm678 = vcmp.gt.f32.partialorder %v556, 0.0
        %vm679 = vcmp.gt.f32.partialorder %v548, 0.0
        %vm680 = vcmp.gt.f32.partialorder %v557, 0.0
        %vm681 = vcmp.gt.f32.partialorder %v549, 0.0
        %vm682 = vcmp.gt.f32.partialorder %v558, 0.0
        %vm683 = vcmp.gt.f32.partialorder %v550, 0.0
        %vm684 = vcmp.gt.f32.partialorder %v559, 0.0
        %vm685 = vcmp.gt.f32.partialorder %v551, 0.0
        %vm686 = vcmp.gt.f32.partialorder %v560, 0.0
        %vm687 = vcmp.gt.f32.partialorder %v552, 0.0
        %vm688 = vcmp.gt.f32.partialorder %v561, 0.0
        %vm689 = vcmp.gt.f32.partialorder %v553, 0.0
        %vm690 = vmand %vm658, %vm674
        %vm691 = vmand %vm659, %vm675
        %vm692 = vmand %vm660, %vm676
        %vm693 = vmand %vm661, %vm677
        %vm694 = vmand %vm662, %vm678
        %vm695 = vmand %vm663, %vm679
        %vm696 = vmand %vm664, %vm680
        %vm697 = vmand %vm665, %vm681
        %vm698 = vmand %vm666, %vm682
        %vm699 = vmand %vm667, %vm683
        %vm700 = vmand %vm668, %vm684
        %vm701 = vmand %vm669, %vm685
        %vm702 = vmand %vm670, %vm686
        %vm703 = vmand %vm671, %vm687
        %vm704 = vmand %vm672, %vm688
        %vm705 = vmand %vm673, %vm689
        %vm706 = vcmp.gt.f32.partialorder %v606, 0.0
        %vm707 = vcmp.gt.f32.partialorder %v607, 0.0
        %vm708 = vcmp.gt.f32.partialorder %v608, 0.0
        %vm709 = vcmp.gt.f32.partialorder %v609, 0.0
        %vm710 = vcmp.gt.f32.partialorder %v610, 0.0
        %vm711 = vcmp.gt.f32.partialorder %v611, 0.0
        %vm712 = vcmp.gt.f32.partialorder %v612, 0.0
        %vm713 = vcmp.gt.f32.partialorder %v613, 0.0
        %vm714 = vcmp.gt.f32.partialorder %v614, 0.0
        %vm715 = vcmp.gt.f32.partialorder %v615, 0.0
        %vm716 = vcmp.gt.f32.partialorder %v616, 0.0
        %vm717 = vcmp.gt.f32.partialorder %v617, 0.0
        %vm718 = vcmp.gt.f32.partialorder %v618, 0.0
        %vm719 = vcmp.gt.f32.partialorder %v619, 0.0
        %vm720 = vcmp.gt.f32.partialorder %v620, 0.0
        %vm721 = vcmp.gt.f32.partialorder %v621, 0.0
        %vm722 = vmand %vm690, %vm706
        %vm723 = vmand %vm691, %vm707
        %vm724 = vmand %vm692, %vm708
        %vm725 = vmand %vm693, %vm709
        %vm726 = vmand %vm694, %vm710
        %vm727 = vmand %vm695, %vm711
        %vm728 = vmand %vm696, %vm712
        %vm729 = vmand %vm697, %vm713
        %vm730 = vmand %vm698, %vm714
        %vm731 = vmand %vm699, %vm715
        %vm732 = vmand %vm700, %vm716
        %vm733 = vmand %vm701, %vm717
        %vm734 = vmand %vm702, %vm718
        %vm735 = vmand %vm703, %vm719
        %vm736 = vmand %vm704, %vm720
        %vm737 = vmand %vm705, %vm721
        %v738 = vstv %s655
        %vm739 = vcmp.ge.s32.totalorder %v353, %v738
        %vm740 = vcmp.ge.s32.totalorder %v354, %v738
        %vm741 = vcmp.ge.s32.totalorder %v355, %v738
        %vm742 = vcmp.ge.s32.totalorder %v356, %v738
        %vm743 = vcmp.ge.s32.totalorder %v357, %v738
        %vm744 = vcmp.ge.s32.totalorder %v358, %v738
        %vm745 = vcmp.ge.s32.totalorder %v359, %v738
        %vm746 = vcmp.ge.s32.totalorder %v360, %v738
        %vm747 = vmand %vm722, %vm739
        %vm748 = vmand %vm723, %vm739
        %vm749 = vmand %vm724, %vm740
        %vm750 = vmand %vm725, %vm740
        %vm751 = vmand %vm726, %vm741
        %vm752 = vmand %vm727, %vm741
        %vm753 = vmand %vm728, %vm742
        %vm754 = vmand %vm729, %vm742
        %vm755 = vmand %vm730, %vm743
        %vm756 = vmand %vm731, %vm743
        %vm757 = vmand %vm732, %vm744
        %vm758 = vmand %vm733, %vm744
        %vm759 = vmand %vm734, %vm745
        %vm760 = vmand %vm735, %vm745
        %vm761 = vmand %vm736, %vm746
        %vm762 = vmand %vm737, %vm746
        %v763 = vstv %s657
        %vm764 = vcmp.lt.s32.totalorder %v353, %v763
        %vm765 = vcmp.lt.s32.totalorder %v354, %v763
        %vm766 = vcmp.lt.s32.totalorder %v355, %v763
        %vm767 = vcmp.lt.s32.totalorder %v356, %v763
        %vm768 = vcmp.lt.s32.totalorder %v357, %v763
        %vm769 = vcmp.lt.s32.totalorder %v358, %v763
        %vm770 = vcmp.lt.s32.totalorder %v359, %v763
        %vm771 = vcmp.lt.s32.totalorder %v360, %v763
        %vm772 = vmand %vm747, %vm764
        %vm773 = vmand %vm748, %vm764
        %vm774 = vmand %vm749, %vm765
        %vm775 = vmand %vm750, %vm765
        %vm776 = vmand %vm751, %vm766
        %vm777 = vmand %vm752, %vm766
        %vm778 = vmand %vm753, %vm767
        %vm779 = vmand %vm754, %vm767
        %vm780 = vmand %vm755, %vm768
        %vm781 = vmand %vm756, %vm768
        %vm782 = vmand %vm757, %vm769
        %vm783 = vmand %vm758, %vm769
        %vm784 = vmand %vm759, %vm770
        %vm785 = vmand %vm760, %vm770
        %vm786 = vmand %vm761, %vm771
        %vm787 = vmand %vm762, %vm771
        %vm788 = vcmp.ge.s32.totalorder %v362, 1
        %vm789 = vcmp.ge.s32.totalorder %v363, 1
        %vm790 = vmand %vm772, %vm788
        %vm791 = vmand %vm773, %vm789
        %vm792 = vmand %vm774, %vm788
        %vm793 = vmand %vm775, %vm789
        %vm794 = vmand %vm776, %vm788
        %vm795 = vmand %vm777, %vm789
        %vm796 = vmand %vm778, %vm788
        %vm797 = vmand %vm779, %vm789
        %vm798 = vmand %vm780, %vm788
        %vm799 = vmand %vm781, %vm789
        %vm800 = vmand %vm782, %vm788
        %vm801 = vmand %vm783, %vm789
        %vm802 = vmand %vm784, %vm788
        %vm803 = vmand %vm785, %vm789
        %vm804 = vmand %vm786, %vm788
        %vm805 = vmand %vm787, %vm789
        %v806 = vmul.f32 %v482, %v482
        %v807 = vmul.f32 %v483, %v483
        %v808 = vmul.f32 %v484, %v484
        %v809 = vmul.f32 %v485, %v485
        %v810 = vmul.f32 %v486, %v486
        %v811 = vmul.f32 %v487, %v487
        %v812 = vmul.f32 %v488, %v488
        %v813 = vmul.f32 %v489, %v489
        %v814 = vmul.f32 %v490, %v490
        %v815 = vmul.f32 %v491, %v491
        %v816 = vmul.f32 %v492, %v492
        %v817 = vmul.f32 %v493, %v493
        %v818 = vmul.f32 %v494, %v494
        %v819 = vmul.f32 %v495, %v495
        %v820 = vmul.f32 %v496, %v496
        %v821 = vmul.f32 %v497, %v497
        %v822 = vmul.f32 %v498, %v498
        %v823 = vmul.f32 %v499, %v499
        %v824 = vmul.f32 %v500, %v500
        %v825 = vmul.f32 %v501, %v501
        %v826 = vmul.f32 %v502, %v502
        %v827 = vmul.f32 %v503, %v503
        %v828 = vmul.f32 %v504, %v504
        %v829 = vmul.f32 %v505, %v505
        %v830 = vmul.f32 %v506, %v506
        %v831 = vmul.f32 %v507, %v507
        %v832 = vmul.f32 %v508, %v508
        %v833 = vmul.f32 %v509, %v509
        %v834 = vmul.f32 %v510, %v510
        %v835 = vmul.f32 %v511, %v511
        %v836 = vmul.f32 %v512, %v512
        %v837 = vmul.f32 %v513, %v513
        %v838 = vadd.f32 %v806, %v822
        %v839 = vadd.f32 %v807, %v823
        %v840 = vadd.f32 %v808, %v824
        %v841 = vadd.f32 %v809, %v825
        %v842 = vadd.f32 %v810, %v826
        %v843 = vadd.f32 %v811, %v827
        %v844 = vadd.f32 %v812, %v828
        %v845 = vadd.f32 %v813, %v829
        %v846 = vadd.f32 %v814, %v830
        %v847 = vadd.f32 %v815, %v831
        %v848 = vadd.f32 %v816, %v832
        %v849 = vadd.f32 %v817, %v833
        %v850 = vadd.f32 %v818, %v834
        %v851 = vadd.f32 %v819, %v835
        %v852 = vadd.f32 %v820, %v836
        %v853 = vadd.f32 %v821, %v837
        %v854 = vmul.f32 %v622, %v622
        %v855 = vmul.f32 %v623, %v623
        %v856 = vmul.f32 %v624, %v624
        %v857 = vmul.f32 %v625, %v625
        %v858 = vmul.f32 %v626, %v626
        %v859 = vmul.f32 %v627, %v627
        %v860 = vmul.f32 %v628, %v628
        %v861 = vmul.f32 %v629, %v629
        %v862 = vmul.f32 %v630, %v630
        %v863 = vmul.f32 %v631, %v631
        %v864 = vmul.f32 %v632, %v632
        %v865 = vmul.f32 %v633, %v633
        %v866 = vmul.f32 %v634, %v634
        %v867 = vmul.f32 %v635, %v635
        %v868 = vmul.f32 %v636, %v636
        %v869 = vmul.f32 %v637, %v637
        %v870 = vmul.f32 %v638, %v638
        %v871 = vmul.f32 %v639, %v639
        %v872 = vmul.f32 %v640, %v640
        %v873 = vmul.f32 %v641, %v641
        %v874 = vmul.f32 %v642, %v642
        %v875 = vmul.f32 %v643, %v643
        %v876 = vmul.f32 %v644, %v644
        %v877 = vmul.f32 %v645, %v645
        %v878 = vmul.f32 %v646, %v646
        %v879 = vmul.f32 %v647, %v647
        %v880 = vmul.f32 %v648, %v648
        %v881 = vmul.f32 %v649, %v649
        %v882 = vmul.f32 %v650, %v650
        %v883 = vmul.f32 %v651, %v651
        %v884 = vmul.f32 %v652, %v652
        %v885 = vmul.f32 %v653, %v653
        %v886 = vadd.f32 %v854, %v870
        %v887 = vadd.f32 %v855, %v871
        %v888 = vadd.f32 %v856, %v872
        %v889 = vadd.f32 %v857, %v873
        %v890 = vadd.f32 %v858, %v874
        %v891 = vadd.f32 %v859, %v875
        %v892 = vadd.f32 %v860, %v876
        %v893 = vadd.f32 %v861, %v877
        %v894 = vadd.f32 %v862, %v878
        %v895 = vadd.f32 %v863, %v879
        %v896 = vadd.f32 %v864, %v880
        %v897 = vadd.f32 %v865, %v881
        %v898 = vadd.f32 %v866, %v882
        %v899 = vadd.f32 %v867, %v883
        %v900 = vadd.f32 %v868, %v884
        %v901 = vadd.f32 %v869, %v885
        %v902 = vsub.f32 %v838, %v886
        %v903 = vsub.f32 %v839, %v887
        %v904 = vsub.f32 %v840, %v888
        %v905 = vsub.f32 %v841, %v889
        %v906 = vsub.f32 %v842, %v890
        %v907 = vsub.f32 %v843, %v891
        %v908 = vsub.f32 %v844, %v892
        %v909 = vsub.f32 %v845, %v893
        %v910 = vsub.f32 %v846, %v894
        %v911 = vsub.f32 %v847, %v895
        %v912 = vsub.f32 %v848, %v896
        %v913 = vsub.f32 %v849, %v897
        %v914 = vsub.f32 %v850, %v898
        %v915 = vsub.f32 %v851, %v899
        %v916 = vsub.f32 %v852, %v900
        %v917 = vsub.f32 %v853, %v901
        %v918 = vand.u32 2147483647, %v902
        %v919 = vand.u32 2147483647, %v903
        %v920 = vand.u32 2147483647, %v904
        %v921 = vand.u32 2147483647, %v905
        %v922 = vand.u32 2147483647, %v906
        %v923 = vand.u32 2147483647, %v907
        %v924 = vand.u32 2147483647, %v908
        %v925 = vand.u32 2147483647, %v909
        %v926 = vand.u32 2147483647, %v910
        %v927 = vand.u32 2147483647, %v911
        %v928 = vand.u32 2147483647, %v912
        %v929 = vand.u32 2147483647, %v913
        %v930 = vand.u32 2147483647, %v914
        %v931 = vand.u32 2147483647, %v915
        %v932 = vand.u32 2147483647, %v916
        %v933 = vand.u32 2147483647, %v917
        %v934 = vsel %vm790, %v918, 0.0
        %v935 = vsel %vm791, %v919, 0.0
        %v936 = vsel %vm792, %v920, 0.0
        %v937 = vsel %vm793, %v921, 0.0
        %v938 = vsel %vm794, %v922, 0.0
        %v939 = vsel %vm795, %v923, 0.0
        %v940 = vsel %vm796, %v924, 0.0
        %v941 = vsel %vm797, %v925, 0.0
        %v942 = vsel %vm798, %v926, 0.0
        %v943 = vsel %vm799, %v927, 0.0
        %v944 = vsel %vm800, %v928, 0.0
        %v945 = vsel %vm801, %v929, 0.0
        %v946 = vsel %vm802, %v930, 0.0
        %v947 = vsel %vm803, %v931, 0.0
        %v948 = vsel %vm804, %v932, 0.0
        %v949 = vsel %vm805, %v933, 0.0
        %v950 = vadd.f32 %v934, %v935
        %v951 = vadd.f32 %v950, %v936
        %v952 = vadd.f32 %v951, %v937
        %v953 = vadd.f32 %v952, %v938
        %v954 = vadd.f32 %v953, %v939
        %v955 = vadd.f32 %v954, %v940
        %v956 = vadd.f32 %v955, %v941
        %v957 = vadd.f32 %v956, %v942
        %v958 = vadd.f32 %v957, %v943
        %v959 = vadd.f32 %v958, %v944
        %v960 = vadd.f32 %v959, %v945
        %v961 = vadd.f32 %v960, %v946
        %v962 = vadd.f32 %v961, %v947
        %v963 = vadd.f32 %v962, %v948
        %v964 = vadd.f32 %v963, %v949
        %965 = vadd.xlane.f32.xlu0 %v964
        %v966 = vpop.xlane.xlu0 %965
        %v967 = vrot.slane %v966, 4
        %v968 = vadd.f32 %v966, %v967
        %v969 = vrot.slane %v968, 2
        %v970 = vadd.f32 %v968, %v969
        %v971 = vrot.slane %v970, 1
        %v972 = vadd.f32 %v970, %v971
        %s973 = vtos %v972
        %v974 = vadd.f32 %v482, 1e-10
        %v975 = vadd.f32 %v483, 1e-10
        %v976 = vadd.f32 %v484, 1e-10
        %v977 = vadd.f32 %v485, 1e-10
        %v978 = vadd.f32 %v486, 1e-10
        %v979 = vadd.f32 %v487, 1e-10
        %v980 = vadd.f32 %v488, 1e-10
        %v981 = vadd.f32 %v489, 1e-10
        %v982 = vadd.f32 %v490, 1e-10
        %v983 = vadd.f32 %v491, 1e-10
        %v984 = vadd.f32 %v492, 1e-10
        %v985 = vadd.f32 %v493, 1e-10
        %v986 = vadd.f32 %v494, 1e-10
        %v987 = vadd.f32 %v495, 1e-10
        %v988 = vadd.f32 %v496, 1e-10
        %v989 = vadd.f32 %v497, 1e-10
        %v990 = vand.u32 2147483647, %v498
        %v991 = vand.u32 2147483647, %v499
        %v992 = vand.u32 2147483647, %v500
        %v993 = vand.u32 2147483647, %v501
        %v994 = vand.u32 2147483647, %v502
        %v995 = vand.u32 2147483647, %v503
        %v996 = vand.u32 2147483647, %v504
        %v997 = vand.u32 2147483647, %v505
        %v998 = vand.u32 2147483647, %v506
        %v999 = vand.u32 2147483647, %v507
        %v1000 = vand.u32 2147483647, %v508
        %v1001 = vand.u32 2147483647, %v509
        %v1002 = vand.u32 2147483647, %v510
        %v1003 = vand.u32 2147483647, %v511
        %v1004 = vand.u32 2147483647, %v512
        %v1005 = vand.u32 2147483647, %v513
        %v1006 = vand.u32 2147483647, %v974
        %v1007 = vand.u32 2147483647, %v975
        %v1008 = vand.u32 2147483647, %v976
        %v1009 = vand.u32 2147483647, %v977
        %v1010 = vand.u32 2147483647, %v978
        %v1011 = vand.u32 2147483647, %v979
        %v1012 = vand.u32 2147483647, %v980
        %v1013 = vand.u32 2147483647, %v981
        %v1014 = vand.u32 2147483647, %v982
        %v1015 = vand.u32 2147483647, %v983
        %v1016 = vand.u32 2147483647, %v984
        %v1017 = vand.u32 2147483647, %v985
        %v1018 = vand.u32 2147483647, %v986
        %v1019 = vand.u32 2147483647, %v987
        %v1020 = vand.u32 2147483647, %v988
        %v1021 = vand.u32 2147483647, %v989
        %v1022 = vmin.f32 %v990, %v1006
        %v1023 = vmin.f32 %v991, %v1007
        %v1024 = vmin.f32 %v992, %v1008
        %v1025 = vmin.f32 %v993, %v1009
        %v1026 = vmin.f32 %v994, %v1010
        %v1027 = vmin.f32 %v995, %v1011
        %v1028 = vmin.f32 %v996, %v1012
        %v1029 = vmin.f32 %v997, %v1013
        %v1030 = vmin.f32 %v998, %v1014
        %v1031 = vmin.f32 %v999, %v1015
        %v1032 = vmin.f32 %v1000, %v1016
        %v1033 = vmin.f32 %v1001, %v1017
        %v1034 = vmin.f32 %v1002, %v1018
        %v1035 = vmin.f32 %v1003, %v1019
        %v1036 = vmin.f32 %v1004, %v1020
        %v1037 = vmin.f32 %v1005, %v1021
        %v1038 = vmax.f32 %v990, %v1006
        %v1039 = vmax.f32 %v991, %v1007
        %v1040 = vmax.f32 %v992, %v1008
        %v1041 = vmax.f32 %v993, %v1009
        %v1042 = vmax.f32 %v994, %v1010
        %v1043 = vmax.f32 %v995, %v1011
        %v1044 = vmax.f32 %v996, %v1012
        %v1045 = vmax.f32 %v997, %v1013
        %v1046 = vmax.f32 %v998, %v1014
        %v1047 = vmax.f32 %v999, %v1015
        %v1048 = vmax.f32 %v1000, %v1016
        %v1049 = vmax.f32 %v1001, %v1017
        %v1050 = vmax.f32 %v1002, %v1018
        %v1051 = vmax.f32 %v1003, %v1019
        %v1052 = vmax.f32 %v1004, %v1020
        %v1053 = vmax.f32 %v1005, %v1021
        %v1054 = vrcp.pop %v1038
        %v1055 = vrcp.pop %v1039
        %v1056 = vrcp.pop %v1040
        %v1057 = vrcp.pop %v1041
        %v1058 = vrcp.pop %v1042
        %v1059 = vrcp.pop %v1043
        %v1060 = vrcp.pop %v1044
        %v1061 = vrcp.pop %v1045
        %v1062 = vrcp.pop %v1046
        %v1063 = vrcp.pop %v1047
        %v1064 = vrcp.pop %v1048
        %v1065 = vrcp.pop %v1049
        %v1066 = vrcp.pop %v1050
        %v1067 = vrcp.pop %v1051
        %v1068 = vrcp.pop %v1052
        %v1069 = vrcp.pop %v1053
        %v1070 = vmul.f32 %v1022, %v1054
        %v1071 = vmul.f32 %v1023, %v1055
        %v1072 = vmul.f32 %v1024, %v1056
        %v1073 = vmul.f32 %v1025, %v1057
        %v1074 = vmul.f32 %v1026, %v1058
        %v1075 = vmul.f32 %v1027, %v1059
        %v1076 = vmul.f32 %v1028, %v1060
        %v1077 = vmul.f32 %v1029, %v1061
        %v1078 = vmul.f32 %v1030, %v1062
        %v1079 = vmul.f32 %v1031, %v1063
        %v1080 = vmul.f32 %v1032, %v1064
        %v1081 = vmul.f32 %v1033, %v1065
        %v1082 = vmul.f32 %v1034, %v1066
        %v1083 = vmul.f32 %v1035, %v1067
        %v1084 = vmul.f32 %v1036, %v1068
        %v1085 = vmul.f32 %v1037, %v1069
        %v1086 = vmul.f32 %v1070, %v1070
        %v1087 = vmul.f32 %v1071, %v1071
        %v1088 = vmul.f32 %v1072, %v1072
        %v1089 = vmul.f32 %v1073, %v1073
        %v1090 = vmul.f32 %v1074, %v1074
        %v1091 = vmul.f32 %v1075, %v1075
        %v1092 = vmul.f32 %v1076, %v1076
        %v1093 = vmul.f32 %v1077, %v1077
        %v1094 = vmul.f32 %v1078, %v1078
        %v1095 = vmul.f32 %v1079, %v1079
        %v1096 = vmul.f32 %v1080, %v1080
        %v1097 = vmul.f32 %v1081, %v1081
        %v1098 = vmul.f32 %v1082, %v1082
        %v1099 = vmul.f32 %v1083, %v1083
        %v1100 = vmul.f32 %v1084, %v1084
        %v1101 = vmul.f32 %v1085, %v1085
        %v1102 = vmul.f32 %v1086, 0.0208351
        %v1103 = vmul.f32 %v1087, 0.0208351
        %v1104 = vmul.f32 %v1088, 0.0208351
        %v1105 = vmul.f32 %v1089, 0.0208351
        %v1106 = vmul.f32 %v1090, 0.0208351
        %v1107 = vmul.f32 %v1091, 0.0208351
        %v1108 = vmul.f32 %v1092, 0.0208351
        %v1109 = vmul.f32 %v1093, 0.0208351
        %v1110 = vmul.f32 %v1094, 0.0208351
        %v1111 = vmul.f32 %v1095, 0.0208351
        %v1112 = vmul.f32 %v1096, 0.0208351
        %v1113 = vmul.f32 %v1097, 0.0208351
        %v1114 = vmul.f32 %v1098, 0.0208351
        %v1115 = vmul.f32 %v1099, 0.0208351
        %v1116 = vmul.f32 %v1100, 0.0208351
        %v1117 = vmul.f32 %v1101, 0.0208351
        %v1118 = vsub.f32 %v1102, 0.085133
        %v1119 = vsub.f32 %v1103, 0.085133
        %v1120 = vsub.f32 %v1104, 0.085133
        %v1121 = vsub.f32 %v1105, 0.085133
        %v1122 = vsub.f32 %v1106, 0.085133
        %v1123 = vsub.f32 %v1107, 0.085133
        %v1124 = vsub.f32 %v1108, 0.085133
        %v1125 = vsub.f32 %v1109, 0.085133
        %v1126 = vsub.f32 %v1110, 0.085133
        %v1127 = vsub.f32 %v1111, 0.085133
        %v1128 = vsub.f32 %v1112, 0.085133
        %v1129 = vsub.f32 %v1113, 0.085133
        %v1130 = vsub.f32 %v1114, 0.085133
        %v1131 = vsub.f32 %v1115, 0.085133
        %v1132 = vsub.f32 %v1116, 0.085133
        %v1133 = vsub.f32 %v1117, 0.085133
        %v1134 = vmul.f32 %v1118, %v1086
        %v1135 = vmul.f32 %v1119, %v1087
        %v1136 = vmul.f32 %v1120, %v1088
        %v1137 = vmul.f32 %v1121, %v1089
        %v1138 = vmul.f32 %v1122, %v1090
        %v1139 = vmul.f32 %v1123, %v1091
        %v1140 = vmul.f32 %v1124, %v1092
        %v1141 = vmul.f32 %v1125, %v1093
        %v1142 = vmul.f32 %v1126, %v1094
        %v1143 = vmul.f32 %v1127, %v1095
        %v1144 = vmul.f32 %v1128, %v1096
        %v1145 = vmul.f32 %v1129, %v1097
        %v1146 = vmul.f32 %v1130, %v1098
        %v1147 = vmul.f32 %v1131, %v1099
        %v1148 = vmul.f32 %v1132, %v1100
        %v1149 = vmul.f32 %v1133, %v1101
        %v1150 = vadd.f32 %v1134, 0.180141
        %v1151 = vadd.f32 %v1135, 0.180141
        %v1152 = vadd.f32 %v1136, 0.180141
        %v1153 = vadd.f32 %v1137, 0.180141
        %v1154 = vadd.f32 %v1138, 0.180141
        %v1155 = vadd.f32 %v1139, 0.180141
        %v1156 = vadd.f32 %v1140, 0.180141
        %v1157 = vadd.f32 %v1141, 0.180141
        %v1158 = vadd.f32 %v1142, 0.180141
        %v1159 = vadd.f32 %v1143, 0.180141
        %v1160 = vadd.f32 %v1144, 0.180141
        %v1161 = vadd.f32 %v1145, 0.180141
        %v1162 = vadd.f32 %v1146, 0.180141
        %v1163 = vadd.f32 %v1147, 0.180141
        %v1164 = vadd.f32 %v1148, 0.180141
        %v1165 = vadd.f32 %v1149, 0.180141
        %v1166 = vmul.f32 %v1150, %v1086
        %v1167 = vmul.f32 %v1151, %v1087
        %v1168 = vmul.f32 %v1152, %v1088
        %v1169 = vmul.f32 %v1153, %v1089
        %v1170 = vmul.f32 %v1154, %v1090
        %v1171 = vmul.f32 %v1155, %v1091
        %v1172 = vmul.f32 %v1156, %v1092
        %v1173 = vmul.f32 %v1157, %v1093
        %v1174 = vmul.f32 %v1158, %v1094
        %v1175 = vmul.f32 %v1159, %v1095
        %v1176 = vmul.f32 %v1160, %v1096
        %v1177 = vmul.f32 %v1161, %v1097
        %v1178 = vmul.f32 %v1162, %v1098
        %v1179 = vmul.f32 %v1163, %v1099
        %v1180 = vmul.f32 %v1164, %v1100
        %v1181 = vmul.f32 %v1165, %v1101
        %v1182 = vsub.f32 %v1166, 0.3302995
        %v1183 = vsub.f32 %v1167, 0.3302995
        %v1184 = vsub.f32 %v1168, 0.3302995
        %v1185 = vsub.f32 %v1169, 0.3302995
        %v1186 = vsub.f32 %v1170, 0.3302995
        %v1187 = vsub.f32 %v1171, 0.3302995
        %v1188 = vsub.f32 %v1172, 0.3302995
        %v1189 = vsub.f32 %v1173, 0.3302995
        %v1190 = vsub.f32 %v1174, 0.3302995
        %v1191 = vsub.f32 %v1175, 0.3302995
        %v1192 = vsub.f32 %v1176, 0.3302995
        %v1193 = vsub.f32 %v1177, 0.3302995
        %v1194 = vsub.f32 %v1178, 0.3302995
        %v1195 = vsub.f32 %v1179, 0.3302995
        %v1196 = vsub.f32 %v1180, 0.3302995
        %v1197 = vsub.f32 %v1181, 0.3302995
        %v1198 = vmul.f32 %v1182, %v1086
        %v1199 = vmul.f32 %v1183, %v1087
        %v1200 = vmul.f32 %v1184, %v1088
        %v1201 = vmul.f32 %v1185, %v1089
        %v1202 = vmul.f32 %v1186, %v1090
        %v1203 = vmul.f32 %v1187, %v1091
        %v1204 = vmul.f32 %v1188, %v1092
        %v1205 = vmul.f32 %v1189, %v1093
        %v1206 = vmul.f32 %v1190, %v1094
        %v1207 = vmul.f32 %v1191, %v1095
        %v1208 = vmul.f32 %v1192, %v1096
        %v1209 = vmul.f32 %v1193, %v1097
        %v1210 = vmul.f32 %v1194, %v1098
        %v1211 = vmul.f32 %v1195, %v1099
        %v1212 = vmul.f32 %v1196, %v1100
        %v1213 = vmul.f32 %v1197, %v1101
        %v1214 = vadd.f32 %v1198, 0.999866
        %v1215 = vadd.f32 %v1199, 0.999866
        %v1216 = vadd.f32 %v1200, 0.999866
        %v1217 = vadd.f32 %v1201, 0.999866
        %v1218 = vadd.f32 %v1202, 0.999866
        %v1219 = vadd.f32 %v1203, 0.999866
        %v1220 = vadd.f32 %v1204, 0.999866
        %v1221 = vadd.f32 %v1205, 0.999866
        %v1222 = vadd.f32 %v1206, 0.999866
        %v1223 = vadd.f32 %v1207, 0.999866
        %v1224 = vadd.f32 %v1208, 0.999866
        %v1225 = vadd.f32 %v1209, 0.999866
        %v1226 = vadd.f32 %v1210, 0.999866
        %v1227 = vadd.f32 %v1211, 0.999866
        %v1228 = vadd.f32 %v1212, 0.999866
        %v1229 = vadd.f32 %v1213, 0.999866
        %v1230 = vmul.f32 %v1214, %v1070
        %v1231 = vmul.f32 %v1215, %v1071
        %v1232 = vmul.f32 %v1216, %v1072
        %v1233 = vmul.f32 %v1217, %v1073
        %v1234 = vmul.f32 %v1218, %v1074
        %v1235 = vmul.f32 %v1219, %v1075
        %v1236 = vmul.f32 %v1220, %v1076
        %v1237 = vmul.f32 %v1221, %v1077
        %v1238 = vmul.f32 %v1222, %v1078
        %v1239 = vmul.f32 %v1223, %v1079
        %v1240 = vmul.f32 %v1224, %v1080
        %v1241 = vmul.f32 %v1225, %v1081
        %v1242 = vmul.f32 %v1226, %v1082
        %v1243 = vmul.f32 %v1227, %v1083
        %v1244 = vmul.f32 %v1228, %v1084
        %v1245 = vmul.f32 %v1229, %v1085
        %vm1246 = vcmp.gt.f32.partialorder %v990, %v1006
        %vm1247 = vcmp.gt.f32.partialorder %v991, %v1007
        %vm1248 = vcmp.gt.f32.partialorder %v992, %v1008
        %vm1249 = vcmp.gt.f32.partialorder %v993, %v1009
        %vm1250 = vcmp.gt.f32.partialorder %v994, %v1010
        %vm1251 = vcmp.gt.f32.partialorder %v995, %v1011
        %vm1252 = vcmp.gt.f32.partialorder %v996, %v1012
        %vm1253 = vcmp.gt.f32.partialorder %v997, %v1013
        %vm1254 = vcmp.gt.f32.partialorder %v998, %v1014
        %vm1255 = vcmp.gt.f32.partialorder %v999, %v1015
        %vm1256 = vcmp.gt.f32.partialorder %v1000, %v1016
        %vm1257 = vcmp.gt.f32.partialorder %v1001, %v1017
        %vm1258 = vcmp.gt.f32.partialorder %v1002, %v1018
        %vm1259 = vcmp.gt.f32.partialorder %v1003, %v1019
        %vm1260 = vcmp.gt.f32.partialorder %v1004, %v1020
        %vm1261 = vcmp.gt.f32.partialorder %v1005, %v1021
        %v1262 = vsub.f32 1.5707964, %v1230
        %v1263 = vsub.f32 1.5707964, %v1231
        %v1264 = vsub.f32 1.5707964, %v1232
        %v1265 = vsub.f32 1.5707964, %v1233
        %v1266 = vsub.f32 1.5707964, %v1234
        %v1267 = vsub.f32 1.5707964, %v1235
        %v1268 = vsub.f32 1.5707964, %v1236
        %v1269 = vsub.f32 1.5707964, %v1237
        %v1270 = vsub.f32 1.5707964, %v1238
        %v1271 = vsub.f32 1.5707964, %v1239
        %v1272 = vsub.f32 1.5707964, %v1240
        %v1273 = vsub.f32 1.5707964, %v1241
        %v1274 = vsub.f32 1.5707964, %v1242
        %v1275 = vsub.f32 1.5707964, %v1243
        %v1276 = vsub.f32 1.5707964, %v1244
        %v1277 = vsub.f32 1.5707964, %v1245
        %v1278 = vsel %vm1246, %v1262, %v1230
        %v1279 = vsel %vm1247, %v1263, %v1231
        %v1280 = vsel %vm1248, %v1264, %v1232
        %v1281 = vsel %vm1249, %v1265, %v1233
        %v1282 = vsel %vm1250, %v1266, %v1234
        %v1283 = vsel %vm1251, %v1267, %v1235
        %v1284 = vsel %vm1252, %v1268, %v1236
        %v1285 = vsel %vm1253, %v1269, %v1237
        %v1286 = vsel %vm1254, %v1270, %v1238
        %v1287 = vsel %vm1255, %v1271, %v1239
        %v1288 = vsel %vm1256, %v1272, %v1240
        %v1289 = vsel %vm1257, %v1273, %v1241
        %v1290 = vsel %vm1258, %v1274, %v1242
        %v1291 = vsel %vm1259, %v1275, %v1243
        %v1292 = vsel %vm1260, %v1276, %v1244
        %v1293 = vsel %vm1261, %v1277, %v1245
        %vm1294 = vcmp.lt.f32.partialorder %v498, 0.0
        %vm1295 = vcmp.lt.f32.partialorder %v499, 0.0
        %vm1296 = vcmp.lt.f32.partialorder %v500, 0.0
        %vm1297 = vcmp.lt.f32.partialorder %v501, 0.0
        %vm1298 = vcmp.lt.f32.partialorder %v502, 0.0
        %vm1299 = vcmp.lt.f32.partialorder %v503, 0.0
        %vm1300 = vcmp.lt.f32.partialorder %v504, 0.0
        %vm1301 = vcmp.lt.f32.partialorder %v505, 0.0
        %vm1302 = vcmp.lt.f32.partialorder %v506, 0.0
        %vm1303 = vcmp.lt.f32.partialorder %v507, 0.0
        %vm1304 = vcmp.lt.f32.partialorder %v508, 0.0
        %vm1305 = vcmp.lt.f32.partialorder %v509, 0.0
        %vm1306 = vcmp.lt.f32.partialorder %v510, 0.0
        %vm1307 = vcmp.lt.f32.partialorder %v511, 0.0
        %vm1308 = vcmp.lt.f32.partialorder %v512, 0.0
        %vm1309 = vcmp.lt.f32.partialorder %v513, 0.0
        %vm1310 = vcmp.lt.f32.partialorder %v974, 0.0
        %vm1311 = vcmp.lt.f32.partialorder %v975, 0.0
        %vm1312 = vcmp.lt.f32.partialorder %v976, 0.0
        %vm1313 = vcmp.lt.f32.partialorder %v977, 0.0
        %vm1314 = vcmp.lt.f32.partialorder %v978, 0.0
        %vm1315 = vcmp.lt.f32.partialorder %v979, 0.0
        %vm1316 = vcmp.lt.f32.partialorder %v980, 0.0
        %vm1317 = vcmp.lt.f32.partialorder %v981, 0.0
        %vm1318 = vcmp.lt.f32.partialorder %v982, 0.0
        %vm1319 = vcmp.lt.f32.partialorder %v983, 0.0
        %vm1320 = vcmp.lt.f32.partialorder %v984, 0.0
        %vm1321 = vcmp.lt.f32.partialorder %v985, 0.0
        %vm1322 = vcmp.lt.f32.partialorder %v986, 0.0
        %vm1323 = vcmp.lt.f32.partialorder %v987, 0.0
        %vm1324 = vcmp.lt.f32.partialorder %v988, 0.0
        %vm1325 = vcmp.lt.f32.partialorder %v989, 0.0
        %vm1326 = vmxor %vm1294, %vm1310
        %vm1327 = vmxor %vm1295, %vm1311
        %vm1328 = vmxor %vm1296, %vm1312
        %vm1329 = vmxor %vm1297, %vm1313
        %vm1330 = vmxor %vm1298, %vm1314
        %vm1331 = vmxor %vm1299, %vm1315
        %vm1332 = vmxor %vm1300, %vm1316
        %vm1333 = vmxor %vm1301, %vm1317
        %vm1334 = vmxor %vm1302, %vm1318
        %vm1335 = vmxor %vm1303, %vm1319
        %vm1336 = vmxor %vm1304, %vm1320
        %vm1337 = vmxor %vm1305, %vm1321
        %vm1338 = vmxor %vm1306, %vm1322
        %vm1339 = vmxor %vm1307, %vm1323
        %vm1340 = vmxor %vm1308, %vm1324
        %vm1341 = vmxor %vm1309, %vm1325
        %v1342 = vsub.f32 0.0, %v1278
        %v1343 = vsub.f32 0.0, %v1279
        %v1344 = vsub.f32 0.0, %v1280
        %v1345 = vsub.f32 0.0, %v1281
        %v1346 = vsub.f32 0.0, %v1282
        %v1347 = vsub.f32 0.0, %v1283
        %v1348 = vsub.f32 0.0, %v1284
        %v1349 = vsub.f32 0.0, %v1285
        %v1350 = vsub.f32 0.0, %v1286
        %v1351 = vsub.f32 0.0, %v1287
        %v1352 = vsub.f32 0.0, %v1288
        %v1353 = vsub.f32 0.0, %v1289
        %v1354 = vsub.f32 0.0, %v1290
        %v1355 = vsub.f32 0.0, %v1291
        %v1356 = vsub.f32 0.0, %v1292
        %v1357 = vsub.f32 0.0, %v1293
        %v1358 = vsel %vm1326, %v1342, %v1278
        %v1359 = vsel %vm1327, %v1343, %v1279
        %v1360 = vsel %vm1328, %v1344, %v1280
        %v1361 = vsel %vm1329, %v1345, %v1281
        %v1362 = vsel %vm1330, %v1346, %v1282
        %v1363 = vsel %vm1331, %v1347, %v1283
        %v1364 = vsel %vm1332, %v1348, %v1284
        %v1365 = vsel %vm1333, %v1349, %v1285
        %v1366 = vsel %vm1334, %v1350, %v1286
        %v1367 = vsel %vm1335, %v1351, %v1287
        %v1368 = vsel %vm1336, %v1352, %v1288
        %v1369 = vsel %vm1337, %v1353, %v1289
        %v1370 = vsel %vm1338, %v1354, %v1290
        %v1371 = vsel %vm1339, %v1355, %v1291
        %v1372 = vsel %vm1340, %v1356, %v1292
        %v1373 = vsel %vm1341, %v1357, %v1293
        %v1374 = vadd.f32 %v622, 1e-10
        %v1375 = vadd.f32 %v623, 1e-10
        %v1376 = vadd.f32 %v624, 1e-10
        %v1377 = vadd.f32 %v625, 1e-10
        %v1378 = vadd.f32 %v626, 1e-10
        %v1379 = vadd.f32 %v627, 1e-10
        %v1380 = vadd.f32 %v628, 1e-10
        %v1381 = vadd.f32 %v629, 1e-10
        %v1382 = vadd.f32 %v630, 1e-10
        %v1383 = vadd.f32 %v631, 1e-10
        %v1384 = vadd.f32 %v632, 1e-10
        %v1385 = vadd.f32 %v633, 1e-10
        %v1386 = vadd.f32 %v634, 1e-10
        %v1387 = vadd.f32 %v635, 1e-10
        %v1388 = vadd.f32 %v636, 1e-10
        %v1389 = vadd.f32 %v637, 1e-10
        %v1390 = vand.u32 2147483647, %v638
        %v1391 = vand.u32 2147483647, %v639
        %v1392 = vand.u32 2147483647, %v640
        %v1393 = vand.u32 2147483647, %v641
        %v1394 = vand.u32 2147483647, %v642
        %v1395 = vand.u32 2147483647, %v643
        %v1396 = vand.u32 2147483647, %v644
        %v1397 = vand.u32 2147483647, %v645
        %v1398 = vand.u32 2147483647, %v646
        %v1399 = vand.u32 2147483647, %v647
        %v1400 = vand.u32 2147483647, %v648
        %v1401 = vand.u32 2147483647, %v649
        %v1402 = vand.u32 2147483647, %v650
        %v1403 = vand.u32 2147483647, %v651
        %v1404 = vand.u32 2147483647, %v652
        %v1405 = vand.u32 2147483647, %v653
        %v1406 = vand.u32 2147483647, %v1374
        %v1407 = vand.u32 2147483647, %v1375
        %v1408 = vand.u32 2147483647, %v1376
        %v1409 = vand.u32 2147483647, %v1377
        %v1410 = vand.u32 2147483647, %v1378
        %v1411 = vand.u32 2147483647, %v1379
        %v1412 = vand.u32 2147483647, %v1380
        %v1413 = vand.u32 2147483647, %v1381
        %v1414 = vand.u32 2147483647, %v1382
        %v1415 = vand.u32 2147483647, %v1383
        %v1416 = vand.u32 2147483647, %v1384
        %v1417 = vand.u32 2147483647, %v1385
        %v1418 = vand.u32 2147483647, %v1386
        %v1419 = vand.u32 2147483647, %v1387
        %v1420 = vand.u32 2147483647, %v1388
        %v1421 = vand.u32 2147483647, %v1389
        %v1422 = vmin.f32 %v1390, %v1406
        %v1423 = vmin.f32 %v1391, %v1407
        %v1424 = vmin.f32 %v1392, %v1408
        %v1425 = vmin.f32 %v1393, %v1409
        %v1426 = vmin.f32 %v1394, %v1410
        %v1427 = vmin.f32 %v1395, %v1411
        %v1428 = vmin.f32 %v1396, %v1412
        %v1429 = vmin.f32 %v1397, %v1413
        %v1430 = vmin.f32 %v1398, %v1414
        %v1431 = vmin.f32 %v1399, %v1415
        %v1432 = vmin.f32 %v1400, %v1416
        %v1433 = vmin.f32 %v1401, %v1417
        %v1434 = vmin.f32 %v1402, %v1418
        %v1435 = vmin.f32 %v1403, %v1419
        %v1436 = vmin.f32 %v1404, %v1420
        %v1437 = vmin.f32 %v1405, %v1421
        %v1438 = vmax.f32 %v1390, %v1406
        %v1439 = vmax.f32 %v1391, %v1407
        %v1440 = vmax.f32 %v1392, %v1408
        %v1441 = vmax.f32 %v1393, %v1409
        %v1442 = vmax.f32 %v1394, %v1410
        %v1443 = vmax.f32 %v1395, %v1411
        %v1444 = vmax.f32 %v1396, %v1412
        %v1445 = vmax.f32 %v1397, %v1413
        %v1446 = vmax.f32 %v1398, %v1414
        %v1447 = vmax.f32 %v1399, %v1415
        %v1448 = vmax.f32 %v1400, %v1416
        %v1449 = vmax.f32 %v1401, %v1417
        %v1450 = vmax.f32 %v1402, %v1418
        %v1451 = vmax.f32 %v1403, %v1419
        %v1452 = vmax.f32 %v1404, %v1420
        %v1453 = vmax.f32 %v1405, %v1421
        %v1454 = vrcp.pop %v1438
        %v1455 = vrcp.pop %v1439
        %v1456 = vrcp.pop %v1440
        %v1457 = vrcp.pop %v1441
        %v1458 = vrcp.pop %v1442
        %v1459 = vrcp.pop %v1443
        %v1460 = vrcp.pop %v1444
        %v1461 = vrcp.pop %v1445
        %v1462 = vrcp.pop %v1446
        %v1463 = vrcp.pop %v1447
        %v1464 = vrcp.pop %v1448
        %v1465 = vrcp.pop %v1449
        %v1466 = vrcp.pop %v1450
        %v1467 = vrcp.pop %v1451
        %v1468 = vrcp.pop %v1452
        %v1469 = vrcp.pop %v1453
        %v1470 = vmul.f32 %v1422, %v1454
        %v1471 = vmul.f32 %v1423, %v1455
        %v1472 = vmul.f32 %v1424, %v1456
        %v1473 = vmul.f32 %v1425, %v1457
        %v1474 = vmul.f32 %v1426, %v1458
        %v1475 = vmul.f32 %v1427, %v1459
        %v1476 = vmul.f32 %v1428, %v1460
        %v1477 = vmul.f32 %v1429, %v1461
        %v1478 = vmul.f32 %v1430, %v1462
        %v1479 = vmul.f32 %v1431, %v1463
        %v1480 = vmul.f32 %v1432, %v1464
        %v1481 = vmul.f32 %v1433, %v1465
        %v1482 = vmul.f32 %v1434, %v1466
        %v1483 = vmul.f32 %v1435, %v1467
        %v1484 = vmul.f32 %v1436, %v1468
        %v1485 = vmul.f32 %v1437, %v1469
        %v1486 = vmul.f32 %v1470, %v1470
        %v1487 = vmul.f32 %v1471, %v1471
        %v1488 = vmul.f32 %v1472, %v1472
        %v1489 = vmul.f32 %v1473, %v1473
        %v1490 = vmul.f32 %v1474, %v1474
        %v1491 = vmul.f32 %v1475, %v1475
        %v1492 = vmul.f32 %v1476, %v1476
        %v1493 = vmul.f32 %v1477, %v1477
        %v1494 = vmul.f32 %v1478, %v1478
        %v1495 = vmul.f32 %v1479, %v1479
        %v1496 = vmul.f32 %v1480, %v1480
        %v1497 = vmul.f32 %v1481, %v1481
        %v1498 = vmul.f32 %v1482, %v1482
        %v1499 = vmul.f32 %v1483, %v1483
        %v1500 = vmul.f32 %v1484, %v1484
        %v1501 = vmul.f32 %v1485, %v1485
        %v1502 = vmul.f32 %v1486, 0.0208351
        %v1503 = vmul.f32 %v1487, 0.0208351
        %v1504 = vmul.f32 %v1488, 0.0208351
        %v1505 = vmul.f32 %v1489, 0.0208351
        %v1506 = vmul.f32 %v1490, 0.0208351
        %v1507 = vmul.f32 %v1491, 0.0208351
        %v1508 = vmul.f32 %v1492, 0.0208351
        %v1509 = vmul.f32 %v1493, 0.0208351
        %v1510 = vmul.f32 %v1494, 0.0208351
        %v1511 = vmul.f32 %v1495, 0.0208351
        %v1512 = vmul.f32 %v1496, 0.0208351
        %v1513 = vmul.f32 %v1497, 0.0208351
        %v1514 = vmul.f32 %v1498, 0.0208351
        %v1515 = vmul.f32 %v1499, 0.0208351
        %v1516 = vmul.f32 %v1500, 0.0208351
        %v1517 = vmul.f32 %v1501, 0.0208351
        %v1518 = vsub.f32 %v1502, 0.085133
        %v1519 = vsub.f32 %v1503, 0.085133
        %v1520 = vsub.f32 %v1504, 0.085133
        %v1521 = vsub.f32 %v1505, 0.085133
        %v1522 = vsub.f32 %v1506, 0.085133
        %v1523 = vsub.f32 %v1507, 0.085133
        %v1524 = vsub.f32 %v1508, 0.085133
        %v1525 = vsub.f32 %v1509, 0.085133
        %v1526 = vsub.f32 %v1510, 0.085133
        %v1527 = vsub.f32 %v1511, 0.085133
        %v1528 = vsub.f32 %v1512, 0.085133
        %v1529 = vsub.f32 %v1513, 0.085133
        %v1530 = vsub.f32 %v1514, 0.085133
        %v1531 = vsub.f32 %v1515, 0.085133
        %v1532 = vsub.f32 %v1516, 0.085133
        %v1533 = vsub.f32 %v1517, 0.085133
        %v1534 = vmul.f32 %v1518, %v1486
        %v1535 = vmul.f32 %v1519, %v1487
        %v1536 = vmul.f32 %v1520, %v1488
        %v1537 = vmul.f32 %v1521, %v1489
        %v1538 = vmul.f32 %v1522, %v1490
        %v1539 = vmul.f32 %v1523, %v1491
        %v1540 = vmul.f32 %v1524, %v1492
        %v1541 = vmul.f32 %v1525, %v1493
        %v1542 = vmul.f32 %v1526, %v1494
        %v1543 = vmul.f32 %v1527, %v1495
        %v1544 = vmul.f32 %v1528, %v1496
        %v1545 = vmul.f32 %v1529, %v1497
        %v1546 = vmul.f32 %v1530, %v1498
        %v1547 = vmul.f32 %v1531, %v1499
        %v1548 = vmul.f32 %v1532, %v1500
        %v1549 = vmul.f32 %v1533, %v1501
        %v1550 = vadd.f32 %v1534, 0.180141
        %v1551 = vadd.f32 %v1535, 0.180141
        %v1552 = vadd.f32 %v1536, 0.180141
        %v1553 = vadd.f32 %v1537, 0.180141
        %v1554 = vadd.f32 %v1538, 0.180141
        %v1555 = vadd.f32 %v1539, 0.180141
        %v1556 = vadd.f32 %v1540, 0.180141
        %v1557 = vadd.f32 %v1541, 0.180141
        %v1558 = vadd.f32 %v1542, 0.180141
        %v1559 = vadd.f32 %v1543, 0.180141
        %v1560 = vadd.f32 %v1544, 0.180141
        %v1561 = vadd.f32 %v1545, 0.180141
        %v1562 = vadd.f32 %v1546, 0.180141
        %v1563 = vadd.f32 %v1547, 0.180141
        %v1564 = vadd.f32 %v1548, 0.180141
        %v1565 = vadd.f32 %v1549, 0.180141
        %v1566 = vmul.f32 %v1550, %v1486
        %v1567 = vmul.f32 %v1551, %v1487
        %v1568 = vmul.f32 %v1552, %v1488
        %v1569 = vmul.f32 %v1553, %v1489
        %v1570 = vmul.f32 %v1554, %v1490
        %v1571 = vmul.f32 %v1555, %v1491
        %v1572 = vmul.f32 %v1556, %v1492
        %v1573 = vmul.f32 %v1557, %v1493
        %v1574 = vmul.f32 %v1558, %v1494
        %v1575 = vmul.f32 %v1559, %v1495
        %v1576 = vmul.f32 %v1560, %v1496
        %v1577 = vmul.f32 %v1561, %v1497
        %v1578 = vmul.f32 %v1562, %v1498
        %v1579 = vmul.f32 %v1563, %v1499
        %v1580 = vmul.f32 %v1564, %v1500
        %v1581 = vmul.f32 %v1565, %v1501
        %v1582 = vsub.f32 %v1566, 0.3302995
        %v1583 = vsub.f32 %v1567, 0.3302995
        %v1584 = vsub.f32 %v1568, 0.3302995
        %v1585 = vsub.f32 %v1569, 0.3302995
        %v1586 = vsub.f32 %v1570, 0.3302995
        %v1587 = vsub.f32 %v1571, 0.3302995
        %v1588 = vsub.f32 %v1572, 0.3302995
        %v1589 = vsub.f32 %v1573, 0.3302995
        %v1590 = vsub.f32 %v1574, 0.3302995
        %v1591 = vsub.f32 %v1575, 0.3302995
        %v1592 = vsub.f32 %v1576, 0.3302995
        %v1593 = vsub.f32 %v1577, 0.3302995
        %v1594 = vsub.f32 %v1578, 0.3302995
        %v1595 = vsub.f32 %v1579, 0.3302995
        %v1596 = vsub.f32 %v1580, 0.3302995
        %v1597 = vsub.f32 %v1581, 0.3302995
        %v1598 = vmul.f32 %v1582, %v1486
        %v1599 = vmul.f32 %v1583, %v1487
        %v1600 = vmul.f32 %v1584, %v1488
        %v1601 = vmul.f32 %v1585, %v1489
        %v1602 = vmul.f32 %v1586, %v1490
        %v1603 = vmul.f32 %v1587, %v1491
        %v1604 = vmul.f32 %v1588, %v1492
        %v1605 = vmul.f32 %v1589, %v1493
        %v1606 = vmul.f32 %v1590, %v1494
        %v1607 = vmul.f32 %v1591, %v1495
        %v1608 = vmul.f32 %v1592, %v1496
        %v1609 = vmul.f32 %v1593, %v1497
        %v1610 = vmul.f32 %v1594, %v1498
        %v1611 = vmul.f32 %v1595, %v1499
        %v1612 = vmul.f32 %v1596, %v1500
        %v1613 = vmul.f32 %v1597, %v1501
        %v1614 = vadd.f32 %v1598, 0.999866
        %v1615 = vadd.f32 %v1599, 0.999866
        %v1616 = vadd.f32 %v1600, 0.999866
        %v1617 = vadd.f32 %v1601, 0.999866
        %v1618 = vadd.f32 %v1602, 0.999866
        %v1619 = vadd.f32 %v1603, 0.999866
        %v1620 = vadd.f32 %v1604, 0.999866
        %v1621 = vadd.f32 %v1605, 0.999866
        %v1622 = vadd.f32 %v1606, 0.999866
        %v1623 = vadd.f32 %v1607, 0.999866
        %v1624 = vadd.f32 %v1608, 0.999866
        %v1625 = vadd.f32 %v1609, 0.999866
        %v1626 = vadd.f32 %v1610, 0.999866
        %v1627 = vadd.f32 %v1611, 0.999866
        %v1628 = vadd.f32 %v1612, 0.999866
        %v1629 = vadd.f32 %v1613, 0.999866
        %v1630 = vmul.f32 %v1614, %v1470
        %v1631 = vmul.f32 %v1615, %v1471
        %v1632 = vmul.f32 %v1616, %v1472
        %v1633 = vmul.f32 %v1617, %v1473
        %v1634 = vmul.f32 %v1618, %v1474
        %v1635 = vmul.f32 %v1619, %v1475
        %v1636 = vmul.f32 %v1620, %v1476
        %v1637 = vmul.f32 %v1621, %v1477
        %v1638 = vmul.f32 %v1622, %v1478
        %v1639 = vmul.f32 %v1623, %v1479
        %v1640 = vmul.f32 %v1624, %v1480
        %v1641 = vmul.f32 %v1625, %v1481
        %v1642 = vmul.f32 %v1626, %v1482
        %v1643 = vmul.f32 %v1627, %v1483
        %v1644 = vmul.f32 %v1628, %v1484
        %v1645 = vmul.f32 %v1629, %v1485
        %vm1646 = vcmp.gt.f32.partialorder %v1390, %v1406
        %vm1647 = vcmp.gt.f32.partialorder %v1391, %v1407
        %vm1648 = vcmp.gt.f32.partialorder %v1392, %v1408
        %vm1649 = vcmp.gt.f32.partialorder %v1393, %v1409
        %vm1650 = vcmp.gt.f32.partialorder %v1394, %v1410
        %vm1651 = vcmp.gt.f32.partialorder %v1395, %v1411
        %vm1652 = vcmp.gt.f32.partialorder %v1396, %v1412
        %vm1653 = vcmp.gt.f32.partialorder %v1397, %v1413
        %vm1654 = vcmp.gt.f32.partialorder %v1398, %v1414
        %vm1655 = vcmp.gt.f32.partialorder %v1399, %v1415
        %vm1656 = vcmp.gt.f32.partialorder %v1400, %v1416
        %vm1657 = vcmp.gt.f32.partialorder %v1401, %v1417
        %vm1658 = vcmp.gt.f32.partialorder %v1402, %v1418
        %vm1659 = vcmp.gt.f32.partialorder %v1403, %v1419
        %vm1660 = vcmp.gt.f32.partialorder %v1404, %v1420
        %vm1661 = vcmp.gt.f32.partialorder %v1405, %v1421
        %v1662 = vsub.f32 1.5707964, %v1630
        %v1663 = vsub.f32 1.5707964, %v1631
        %v1664 = vsub.f32 1.5707964, %v1632
        %v1665 = vsub.f32 1.5707964, %v1633
        %v1666 = vsub.f32 1.5707964, %v1634
        %v1667 = vsub.f32 1.5707964, %v1635
        %v1668 = vsub.f32 1.5707964, %v1636
        %v1669 = vsub.f32 1.5707964, %v1637
        %v1670 = vsub.f32 1.5707964, %v1638
        %v1671 = vsub.f32 1.5707964, %v1639
        %v1672 = vsub.f32 1.5707964, %v1640
        %v1673 = vsub.f32 1.5707964, %v1641
        %v1674 = vsub.f32 1.5707964, %v1642
        %v1675 = vsub.f32 1.5707964, %v1643
        %v1676 = vsub.f32 1.5707964, %v1644
        %v1677 = vsub.f32 1.5707964, %v1645
        %v1678 = vsel %vm1646, %v1662, %v1630
        %v1679 = vsel %vm1647, %v1663, %v1631
        %v1680 = vsel %vm1648, %v1664, %v1632
        %v1681 = vsel %vm1649, %v1665, %v1633
        %v1682 = vsel %vm1650, %v1666, %v1634
        %v1683 = vsel %vm1651, %v1667, %v1635
        %v1684 = vsel %vm1652, %v1668, %v1636
        %v1685 = vsel %vm1653, %v1669, %v1637
        %v1686 = vsel %vm1654, %v1670, %v1638
        %v1687 = vsel %vm1655, %v1671, %v1639
        %v1688 = vsel %vm1656, %v1672, %v1640
        %v1689 = vsel %vm1657, %v1673, %v1641
        %v1690 = vsel %vm1658, %v1674, %v1642
        %v1691 = vsel %vm1659, %v1675, %v1643
        %v1692 = vsel %vm1660, %v1676, %v1644
        %v1693 = vsel %vm1661, %v1677, %v1645
        %vm1694 = vcmp.lt.f32.partialorder %v638, 0.0
        %vm1695 = vcmp.lt.f32.partialorder %v639, 0.0
        %vm1696 = vcmp.lt.f32.partialorder %v640, 0.0
        %vm1697 = vcmp.lt.f32.partialorder %v641, 0.0
        %vm1698 = vcmp.lt.f32.partialorder %v642, 0.0
        %vm1699 = vcmp.lt.f32.partialorder %v643, 0.0
        %vm1700 = vcmp.lt.f32.partialorder %v644, 0.0
        %vm1701 = vcmp.lt.f32.partialorder %v645, 0.0
        %vm1702 = vcmp.lt.f32.partialorder %v646, 0.0
        %vm1703 = vcmp.lt.f32.partialorder %v647, 0.0
        %vm1704 = vcmp.lt.f32.partialorder %v648, 0.0
        %vm1705 = vcmp.lt.f32.partialorder %v649, 0.0
        %vm1706 = vcmp.lt.f32.partialorder %v650, 0.0
        %vm1707 = vcmp.lt.f32.partialorder %v651, 0.0
        %vm1708 = vcmp.lt.f32.partialorder %v652, 0.0
        %vm1709 = vcmp.lt.f32.partialorder %v653, 0.0
        %vm1710 = vcmp.lt.f32.partialorder %v1374, 0.0
        %vm1711 = vcmp.lt.f32.partialorder %v1375, 0.0
        %vm1712 = vcmp.lt.f32.partialorder %v1376, 0.0
        %vm1713 = vcmp.lt.f32.partialorder %v1377, 0.0
        %vm1714 = vcmp.lt.f32.partialorder %v1378, 0.0
        %vm1715 = vcmp.lt.f32.partialorder %v1379, 0.0
        %vm1716 = vcmp.lt.f32.partialorder %v1380, 0.0
        %vm1717 = vcmp.lt.f32.partialorder %v1381, 0.0
        %vm1718 = vcmp.lt.f32.partialorder %v1382, 0.0
        %vm1719 = vcmp.lt.f32.partialorder %v1383, 0.0
        %vm1720 = vcmp.lt.f32.partialorder %v1384, 0.0
        %vm1721 = vcmp.lt.f32.partialorder %v1385, 0.0
        %vm1722 = vcmp.lt.f32.partialorder %v1386, 0.0
        %vm1723 = vcmp.lt.f32.partialorder %v1387, 0.0
        %vm1724 = vcmp.lt.f32.partialorder %v1388, 0.0
        %vm1725 = vcmp.lt.f32.partialorder %v1389, 0.0
        %vm1726 = vmxor %vm1694, %vm1710
        %vm1727 = vmxor %vm1695, %vm1711
        %vm1728 = vmxor %vm1696, %vm1712
        %vm1729 = vmxor %vm1697, %vm1713
        %vm1730 = vmxor %vm1698, %vm1714
        %vm1731 = vmxor %vm1699, %vm1715
        %vm1732 = vmxor %vm1700, %vm1716
        %vm1733 = vmxor %vm1701, %vm1717
        %vm1734 = vmxor %vm1702, %vm1718
        %vm1735 = vmxor %vm1703, %vm1719
        %vm1736 = vmxor %vm1704, %vm1720
        %vm1737 = vmxor %vm1705, %vm1721
        %vm1738 = vmxor %vm1706, %vm1722
        %vm1739 = vmxor %vm1707, %vm1723
        %vm1740 = vmxor %vm1708, %vm1724
        %vm1741 = vmxor %vm1709, %vm1725
        %v1742 = vsub.f32 0.0, %v1678
        %v1743 = vsub.f32 0.0, %v1679
        %v1744 = vsub.f32 0.0, %v1680
        %v1745 = vsub.f32 0.0, %v1681
        %v1746 = vsub.f32 0.0, %v1682
        %v1747 = vsub.f32 0.0, %v1683
        %v1748 = vsub.f32 0.0, %v1684
        %v1749 = vsub.f32 0.0, %v1685
        %v1750 = vsub.f32 0.0, %v1686
        %v1751 = vsub.f32 0.0, %v1687
        %v1752 = vsub.f32 0.0, %v1688
        %v1753 = vsub.f32 0.0, %v1689
        %v1754 = vsub.f32 0.0, %v1690
        %v1755 = vsub.f32 0.0, %v1691
        %v1756 = vsub.f32 0.0, %v1692
        %v1757 = vsub.f32 0.0, %v1693
        %v1758 = vsel %vm1726, %v1742, %v1678
        %v1759 = vsel %vm1727, %v1743, %v1679
        %v1760 = vsel %vm1728, %v1744, %v1680
        %v1761 = vsel %vm1729, %v1745, %v1681
        %v1762 = vsel %vm1730, %v1746, %v1682
        %v1763 = vsel %vm1731, %v1747, %v1683
        %v1764 = vsel %vm1732, %v1748, %v1684
        %v1765 = vsel %vm1733, %v1749, %v1685
        %v1766 = vsel %vm1734, %v1750, %v1686
        %v1767 = vsel %vm1735, %v1751, %v1687
        %v1768 = vsel %vm1736, %v1752, %v1688
        %v1769 = vsel %vm1737, %v1753, %v1689
        %v1770 = vsel %vm1738, %v1754, %v1690
        %v1771 = vsel %vm1739, %v1755, %v1691
        %v1772 = vsel %vm1740, %v1756, %v1692
        %v1773 = vsel %vm1741, %v1757, %v1693
        %v1774 = vsub.f32 %v1358, %v1758
        %v1775 = vsub.f32 %v1359, %v1759
        %v1776 = vsub.f32 %v1360, %v1760
        %v1777 = vsub.f32 %v1361, %v1761
        %v1778 = vsub.f32 %v1362, %v1762
        %v1779 = vsub.f32 %v1363, %v1763
        %v1780 = vsub.f32 %v1364, %v1764
        %v1781 = vsub.f32 %v1365, %v1765
        %v1782 = vsub.f32 %v1366, %v1766
        %v1783 = vsub.f32 %v1367, %v1767
        %v1784 = vsub.f32 %v1368, %v1768
        %v1785 = vsub.f32 %v1369, %v1769
        %v1786 = vsub.f32 %v1370, %v1770
        %v1787 = vsub.f32 %v1371, %v1771
        %v1788 = vsub.f32 %v1372, %v1772
        %v1789 = vsub.f32 %v1373, %v1773
        %v1790 = vand.u32 2147483647, %v1774
        %v1791 = vand.u32 2147483647, %v1775
        %v1792 = vand.u32 2147483647, %v1776
        %v1793 = vand.u32 2147483647, %v1777
        %v1794 = vand.u32 2147483647, %v1778
        %v1795 = vand.u32 2147483647, %v1779
        %v1796 = vand.u32 2147483647, %v1780
        %v1797 = vand.u32 2147483647, %v1781
        %v1798 = vand.u32 2147483647, %v1782
        %v1799 = vand.u32 2147483647, %v1783
        %v1800 = vand.u32 2147483647, %v1784
        %v1801 = vand.u32 2147483647, %v1785
        %v1802 = vand.u32 2147483647, %v1786
        %v1803 = vand.u32 2147483647, %v1787
        %v1804 = vand.u32 2147483647, %v1788
        %v1805 = vand.u32 2147483647, %v1789
        %v1806 = vsel %vm790, %v1790, 0.0
        %v1807 = vsel %vm791, %v1791, 0.0
        %v1808 = vsel %vm792, %v1792, 0.0
        %v1809 = vsel %vm793, %v1793, 0.0
        %v1810 = vsel %vm794, %v1794, 0.0
        %v1811 = vsel %vm795, %v1795, 0.0
        %v1812 = vsel %vm796, %v1796, 0.0
        %v1813 = vsel %vm797, %v1797, 0.0
        %v1814 = vsel %vm798, %v1798, 0.0
        %v1815 = vsel %vm799, %v1799, 0.0
        %v1816 = vsel %vm800, %v1800, 0.0
        %v1817 = vsel %vm801, %v1801, 0.0
        %v1818 = vsel %vm802, %v1802, 0.0
        %v1819 = vsel %vm803, %v1803, 0.0
        %v1820 = vsel %vm804, %v1804, 0.0
        %v1821 = vsel %vm805, %v1805, 0.0
        %v1822 = vadd.f32 %v1806, %v1807
        %v1823 = vadd.f32 %v1822, %v1808
        %v1824 = vadd.f32 %v1823, %v1809
        %v1825 = vadd.f32 %v1824, %v1810
        %v1826 = vadd.f32 %v1825, %v1811
        %v1827 = vadd.f32 %v1826, %v1812
        %v1828 = vadd.f32 %v1827, %v1813
        %v1829 = vadd.f32 %v1828, %v1814
        %v1830 = vadd.f32 %v1829, %v1815
        %v1831 = vadd.f32 %v1830, %v1816
        %v1832 = vadd.f32 %v1831, %v1817
        %v1833 = vadd.f32 %v1832, %v1818
        %v1834 = vadd.f32 %v1833, %v1819
        %v1835 = vadd.f32 %v1834, %v1820
        %v1836 = vadd.f32 %v1835, %v1821
        %1837 = vadd.xlane.f32.xlu0 %v1836
        %v1838 = vpop.xlane.xlu0 %1837
        %v1839 = vrot.slane %v1838, 4
        %v1840 = vadd.f32 %v1838, %v1839
        %v1841 = vrot.slane %v1840, 2
        %v1842 = vadd.f32 %v1840, %v1841
        %v1843 = vrot.slane %v1842, 1
        %v1844 = vadd.f32 %v1842, %v1843
        %s1845 = vtos %v1844
        %v1846 = vsel %vm790, 1, 0
        %v1847 = vsel %vm791, 1, 0
        %v1848 = vsel %vm792, 1, 0
        %v1849 = vsel %vm793, 1, 0
        %v1850 = vsel %vm794, 1, 0
        %v1851 = vsel %vm795, 1, 0
        %v1852 = vsel %vm796, 1, 0
        %v1853 = vsel %vm797, 1, 0
        %v1854 = vsel %vm798, 1, 0
        %v1855 = vsel %vm799, 1, 0
        %v1856 = vsel %vm800, 1, 0
        %v1857 = vsel %vm801, 1, 0
        %v1858 = vsel %vm802, 1, 0
        %v1859 = vsel %vm803, 1, 0
        %v1860 = vsel %vm804, 1, 0
        %v1861 = vsel %vm805, 1, 0
        %v1862 = vcvt.s32.f32 %v1846
        %v1863 = vcvt.s32.f32 %v1847
        %v1864 = vcvt.s32.f32 %v1848
        %v1865 = vcvt.s32.f32 %v1849
        %v1866 = vcvt.s32.f32 %v1850
        %v1867 = vcvt.s32.f32 %v1851
        %v1868 = vcvt.s32.f32 %v1852
        %v1869 = vcvt.s32.f32 %v1853
        %v1870 = vcvt.s32.f32 %v1854
        %v1871 = vcvt.s32.f32 %v1855
        %v1872 = vcvt.s32.f32 %v1856
        %v1873 = vcvt.s32.f32 %v1857
        %v1874 = vcvt.s32.f32 %v1858
        %v1875 = vcvt.s32.f32 %v1859
        %v1876 = vcvt.s32.f32 %v1860
        %v1877 = vcvt.s32.f32 %v1861
        %v1878 = vadd.f32 %v1862, %v1863
        %v1879 = vadd.f32 %v1878, %v1864
        %v1880 = vadd.f32 %v1879, %v1865
        %v1881 = vadd.f32 %v1880, %v1866
        %v1882 = vadd.f32 %v1881, %v1867
        %v1883 = vadd.f32 %v1882, %v1868
        %v1884 = vadd.f32 %v1883, %v1869
        %v1885 = vadd.f32 %v1884, %v1870
        %v1886 = vadd.f32 %v1885, %v1871
        %v1887 = vadd.f32 %v1886, %v1872
        %v1888 = vadd.f32 %v1887, %v1873
        %v1889 = vadd.f32 %v1888, %v1874
        %v1890 = vadd.f32 %v1889, %v1875
        %v1891 = vadd.f32 %v1890, %v1876
        %v1892 = vadd.f32 %v1891, %v1877
        %1893 = vadd.xlane.f32.xlu0 %v1892
        %v1894 = vpop.xlane.xlu0 %1893
        %v1895 = vrot.slane %v1894, 4
        %v1896 = vadd.f32 %v1894, %v1895
        %v1897 = vrot.slane %v1896, 2
        %v1898 = vadd.f32 %v1896, %v1897
        %v1899 = vrot.slane %v1898, 1
        %v1900 = vadd.f32 %v1898, %v1899
        %s1901 = vtos %v1900
        %v1902 = vstv %s973
        %v1903 = vstv %s1845
        %v1904 = vstv %s1901
        %1905 = vst [vmem:[%s319] sm:$0xff] %v1902
        %1906 = vst [vmem:[%s319 + $0x8] sm:$0xff] %v1903
        %1907 = vst [vmem:[%s319 + $0x10] sm:$0xff] %v1904
        %p1908 = scmp.lt.s32.totalorder %s21, 4
        %s1909 = scalar_select %p1908, %s21, 4
        %s1910 = smul.addr %s1909, 3
        %s1911 = smul.addr %s1910, 8
        %s1912 = scalar_lea.vmem %s4, %s1911
        // Predicated region
        $region45: #{_scale_sums_pallas.1} parent=35 // pred_check
          %p1913 = pneg %p143
        $region46: #{_scale_sums_pallas.1} parent=35 // pred_check_branch
          %1915 = sbr.rel (%p1913) target = $region48
        $region47: #{_scale_sums_pallas.1} parent=35 // pred_region
          _
        $region48: #{_scale_sums_pallas.1} parent=35 // pred_fallthru
          _
      $region36: #{_scale_sums_pallas.1} parent=5 // pred_fallthru
        _
      %p1916 = scmp.le.s32.totalorder 2, %s16
      // Predicated region
      $region49: #{_scale_sums_pallas.1} parent=5 // pred_check
        %p1917 = pneg %p1916
      $region50: #{_scale_sums_pallas.1} parent=5 // pred_check_branch
        %1919 = sbr.rel (%p1917) target = $region52
      $region51: #{_scale_sums_pallas.1} parent=5 // pred_region
        %s1920 = ssub.s32 %s16, 2
        // Predicated region
        $region53: #{_scale_sums_pallas.1} parent=51 // pred_check
          %p1921 = pneg %p149
        $region54: #{_scale_sums_pallas.1} parent=51 // pred_check_branch
          %1923 = sbr.rel (%p1921) target = $region56
        $region55: #{_scale_sums_pallas.1} parent=51 // pred_region
          %p1924 = scmp.lt.s32.totalorder %s22, 4
          %s1925 = scalar_select %p1924, %s22, 4
          %s1926 = smul.addr %s1925, 3
          %s1927 = smul.addr %s1926, 8
          %s1928 = scalar_lea.vmem %s4, %s1927
        $region56: #{_scale_sums_pallas.1} parent=51 // pred_fallthru
          _
      $region52: #{_scale_sums_pallas.1} parent=5 // pred_fallthru
        _
    $region6: #{_scale_sums_pallas.1} parent=1 // loop_footer
      %s20 = sadd.s32 1, %s16
    $region7: #{_scale_sums_pallas.1} parent=1 // loop_footer_branch
      %15 = sbr.rel target = $region3
    $region8: #{_scale_sums_pallas.1} parent=1 // loop_exit
      _
    %1929 = vsyncpa [#allocation3], 1
    %s1930 = scalar_lea.sflag [#allocation3], 1
    %1931 = vsyncpa %s1930, 1
    %1932 = vsyncpa [#allocation5], 1
    %s1933 = scalar_lea.sflag [#allocation5], 1
    %1934 = vsyncpa %s1933, 1

</llo_original>
